<compile_context>
chip_gen: v5e
topology: v5e:2x2
jax: 0.10.0
libtpu: 0.0.40
codegen_flags: <defaults>
</compile_context>

<pallas_src>
import functools

import jax
import jax.numpy as jnp
from jax.experimental import pallas as pl
from jax.experimental.pallas import tpu as pltpu

HIDDEN = 32   # A3TGCN2 out_channels
LANE = 128    # TPU lane width; gate / feature / output padding target


def a3tgcn_kernel(x_ref, a_ref, w_ref, b_ref, s_ref, wl_ref, bl_ref, out_ref,
                  *, bb, n_nodes, nt):
    # x_ref:   (bb*N*T, 128)  node features, rows ordered (batch, node, period),
    #                          features zero-padded to 128 lanes
    # a_ref:   (N*T, N*T)      kron(A_hat, I_T) -- graph conv on the folded layout
    # w_ref:   (128, 256)      fused GCN@gate weight; z-gate lanes [0,32) of tile 0,
    #                          h-gate lanes [0,32) of tile 1, rest zero
    # b_ref:   (1, 256)        fused bias, same lane layout
    # s_ref:   (N, N*T)        kron(I_N, softmax(attn)) -- weighted sum over periods
    # wl_ref:  (128, 128)      head weight, rows [0,32) x cols [0,T) valid, rest zero
    # bl_ref:  (1, 128)        head bias, cols [0,T) valid
    # out_ref: (bb*N, 128)     rows ordered (batch, node); lanes [0,T) valid
    a = a_ref[...]
    w = w_ref[...]
    b = b_ref[...]
    s = s_ref[...]
    wl = wl_ref[...]
    bl = bl_ref[...]

    # Static unroll over the batch elements folded into this block's rows.
    for bi in range(bb):
        x_b = x_ref[pl.ds(bi * nt, nt), :]                                   # (NT, 128)
        xw = jnp.dot(x_b, w, preferred_element_type=jnp.float32)             # (NT, 256)
        conv = jnp.dot(a, xw, preferred_element_type=jnp.float32) + b        # (NT, 256)

        # H=None in A3TGCN2 -> hidden state is zero; H_new = (1 - Z) * H_tilde.
        # 128-aligned lane split between the z and h gate tiles.
        z = jax.nn.sigmoid(conv[:, :LANE])
        h_tilde = jnp.tanh(conv[:, LANE:])
        h_new = (1.0 - z) * h_tilde                                           # (NT, 128)

        # attention-weighted reduce over periods as a single matmul
        acc = jnp.dot(s, h_new, preferred_element_type=jnp.float32)          # (N, 128)

        h = jnp.maximum(acc, 0.0)                                             # ReLU
        out_ref[pl.ds(bi * n_nodes, n_nodes), :] = (
            jnp.dot(h, wl, preferred_element_type=jnp.float32) + bl)


def temporal_gnn_forward(x, a_hat, params, batch_block=None):
    """x: (B, N, F, T) float32 (PyTorch A3TGCN2 input layout). Returns (B, N, T)."""
    B, N, F_in, T = x.shape
    H = HIDDEN
    NT = N * T
    bb = B if batch_block is None else batch_block
    assert B % bb == 0, "batch_block must divide batch"

    # ---- host-side (tiny) parameter fusion & lane padding --------------------
    probs = jax.nn.softmax(params["attention"])                      # (T,)
    w_z = params["wc"][0] @ params["wg"][0, :H]                      # (F, H)
    b_z = params["bc"][0] @ params["wg"][0, :H] + params["bg"][0]    # (1, H)
    w_h = params["wc"][2] @ params["wg"][2, :H]
    b_h = params["bc"][2] @ params["wg"][2, :H] + params["bg"][2]

    # z gate in its own 128-lane tile, h gate in the next one (vreg-aligned split).
    w_pad = jnp.zeros((LANE, 2 * LANE), jnp.float32)
    w_pad = w_pad.at[:F_in, :H].set(w_z).at[:F_in, LANE:LANE + H].set(w_h)
    b_pad = jnp.zeros((1, 2 * LANE), jnp.float32)
    b_pad = b_pad.at[:, :H].set(b_z).at[:, LANE:LANE + H].set(b_h)

    # Output head padded to 128 lanes -> unmasked lane-dense stores in-kernel.
    wl_pad = jnp.zeros((LANE, LANE), jnp.float32).at[:H, :T].set(params["wl"])
    bl_pad = jnp.zeros((1, LANE), jnp.float32).at[:, :T].set(params["bl"])

    # Folded graph operator and attention reduce (toy size: kron is 128x128).
    a_kron = jnp.kron(a_hat, jnp.eye(T, dtype=jnp.float32))                  # (NT, NT)
    s_probs = jnp.kron(jnp.eye(N, dtype=jnp.float32), probs[None, :])        # (N, NT)

    # (B, N, F, T) -> (B, N, T, F) -> (B*N*T, F) -> zero-pad features to 128 lanes
    x_rows = jnp.transpose(x, (0, 1, 3, 2)).reshape(B * NT, F_in)
    x_pad = jnp.zeros((B * NT, LANE), jnp.float32).at[:, :F_in].set(x_rows)

    kernel = functools.partial(a3tgcn_kernel, bb=bb, n_nodes=N, nt=NT)

    out = pl.pallas_call(
        kernel,
        out_shape=jax.ShapeDtypeStruct((B * N, LANE), jnp.float32),
        grid=(B // bb,),
        in_specs=[
            pl.BlockSpec((bb * NT, LANE), lambda g: (g, 0)),      # x (batch-folded rows)
            pl.BlockSpec((NT, NT), lambda g: (0, 0)),             # kron(A_hat, I_T)
            pl.BlockSpec((LANE, 2 * LANE), lambda g: (0, 0)),     # fused z|h weight
            pl.BlockSpec((1, 2 * LANE), lambda g: (0, 0)),        # fused z|h bias
            pl.BlockSpec((N, NT), lambda g: (0, 0)),              # kron(I_N, probs)
            pl.BlockSpec((LANE, LANE), lambda g: (0, 0)),         # head W (padded)
            pl.BlockSpec((1, LANE), lambda g: (0, 0)),            # head b (padded)
        ],
        out_specs=pl.BlockSpec((bb * N, LANE), lambda g: (g, 0)),
        compiler_params=pltpu.CompilerParams(
            dimension_semantics=("arbitrary",)),
    )(x_pad, a_kron, w_pad, b_pad, s_probs, wl_pad, bl_pad)

    return out[:, :T].reshape(B, N, T)


def build_gcn_adj(edge_index, num_nodes):
    """Dense GCN-normalized adjacency: D^-1/2 (A + I) D^-1/2 (JAX glue)."""
    src, dst = edge_index[0], edge_index[1]
    a = jnp.zeros((num_nodes, num_nodes), jnp.float32).at[dst, src].add(1.0)
    a = a + jnp.eye(num_nodes, dtype=jnp.float32)         # add_self_loops=True
    deg = a.sum(axis=1)
    dinv = jnp.where(deg > 0, 1.0 / jnp.sqrt(deg), 0.0)
    return dinv[:, None] * a * dinv[None, :]


def temporal_gnn_reference(x, a_hat, params):
    """Pure-JAX reference (per-period, unfused) for correctness checking."""
    B, N, F_in, T = x.shape
    probs = jax.nn.softmax(params["attention"])
    acc = jnp.zeros((B, N, HIDDEN), jnp.float32)
    for t in range(T):
        xt = x[:, :, :, t]
        def gcn(k):
            return jnp.einsum("ij,bjh->bih", a_hat, xt @ params["wc"][k]) + params["bc"][k]
        z = jax.nn.sigmoid(gcn(0) @ params["wg"][0, :HIDDEN] + params["bg"][0])
        ht = jnp.tanh(gcn(2) @ params["wg"][2, :HIDDEN] + params["bg"][2])
        acc = acc + probs[t] * ((1.0 - z) * ht)
    h = jnp.maximum(acc, 0.0)
    return h @ params["wl"] + params["bl"]


if __name__ == "__main__":
    B, N, F_in, T = 2, 16, 4, 8          # batch, nodes, node_features, periods
    key = jax.random.PRNGKey(0)
    keys = jax.random.split(key, 8)

    x = jax.random.normal(keys[0], (B, N, F_in, T), jnp.float32)

    # deterministic bidirectional ring graph
    src = jnp.arange(N, dtype=jnp.int32)
    dst = (src + 1) % N
    edge_index = jnp.stack(
        [jnp.concatenate([src, dst]), jnp.concatenate([dst, src])], axis=0)
    a_hat = build_gcn_adj(edge_index, N)

    # deterministic synthetic parameters (shapes from the module __init__)
    params = dict(
        attention=jax.random.uniform(keys[1], (T,), jnp.float32),                  # A3TGCN2 attention
        wc=0.1 * jax.random.normal(keys[2], (3, F_in, HIDDEN), jnp.float32),        # conv_{z,r,h} weights
        bc=0.1 * jax.random.normal(keys[3], (3, 1, HIDDEN), jnp.float32),           # conv_{z,r,h} biases
        wg=0.1 * jax.random.normal(keys[4], (3, 2 * HIDDEN, HIDDEN), jnp.float32),  # linear_{z,r,h} weights (in,out)
        bg=0.1 * jax.random.normal(keys[5], (3, 1, HIDDEN), jnp.float32),           # linear_{z,r,h} biases
        wl=0.1 * jax.random.normal(keys[6], (HIDDEN, T), jnp.float32),              # head Linear(32, periods)
        bl=0.1 * jax.random.normal(keys[7], (1, T), jnp.float32),
    )

    fwd = jax.jit(temporal_gnn_forward)
    out = jax.block_until_ready(fwd(x, a_hat, params))
    ref = temporal_gnn_reference(x, a_hat, params)

    assert out.shape == (B, N, T), out.shape
    assert jnp.allclose(out, ref, rtol=1e-2, atol=1e-2), float(jnp.max(jnp.abs(out - ref)))
    print("KERNEL_OK")
</pallas_src>

<mosaic_0001>
module attributes {stable_mosaic.version = 11 : i64} {
  func.func @a3tgcn_kernel(%arg0: i32, %arg1: memref<256x128xf32, #tpu.memory_space<vmem>>, %arg2: memref<128x128xf32, #tpu.memory_space<vmem>>, %arg3: memref<128x256xf32, #tpu.memory_space<vmem>>, %arg4: memref<1x256xf32, #tpu.memory_space<vmem>>, %arg5: memref<16x128xf32, #tpu.memory_space<vmem>>, %arg6: memref<128x128xf32, #tpu.memory_space<vmem>>, %arg7: memref<1x128xf32, #tpu.memory_space<vmem>>, %arg8: memref<32x128xf32, #tpu.memory_space<vmem>>) attributes {dimension_semantics = [#tpu.dimension_semantics<arbitrary>], iteration_bounds = array<i64: 1>, scalar_prefetch = 0 : i64, scratch_operands = 0 : i64, tpu.core_type = #tpu.core_type<tc>, window_params = [{transform_indices = @transform_0, window_bounds = array<i64: 256, 128>}, {pipeline_mode = #tpu.pipeline_mode<synchronous>, transform_indices = @transform_1, window_bounds = array<i64: 128, 128>}, {pipeline_mode = #tpu.pipeline_mode<synchronous>, transform_indices = @transform_2, window_bounds = array<i64: 128, 256>}, {pipeline_mode = #tpu.pipeline_mode<synchronous>, transform_indices = @transform_3, window_bounds = array<i64: 1, 256>}, {pipeline_mode = #tpu.pipeline_mode<synchronous>, transform_indices = @transform_4, window_bounds = array<i64: 16, 128>}, {pipeline_mode = #tpu.pipeline_mode<synchronous>, transform_indices = @transform_5, window_bounds = array<i64: 128, 128>}, {pipeline_mode = #tpu.pipeline_mode<synchronous>, transform_indices = @transform_6, window_bounds = array<i64: 1, 128>}, {transform_indices = @transform_7, window_bounds = array<i64: 32, 128>}]} {
    %c0 = arith.constant 0 : index
    %c0_0 = arith.constant 0 : index
    %0 = vector.load %arg2[%c0, %c0_0] : memref<128x128xf32, #tpu.memory_space<vmem>>, vector<128x128xf32>
    %c0_1 = arith.constant 0 : index
    %c0_2 = arith.constant 0 : index
    %1 = vector.load %arg3[%c0_1, %c0_2] : memref<128x256xf32, #tpu.memory_space<vmem>>, vector<128x256xf32>
    %c0_3 = arith.constant 0 : index
    %c0_4 = arith.constant 0 : index
    %2 = vector.load %arg4[%c0_3, %c0_4] : memref<1x256xf32, #tpu.memory_space<vmem>>, vector<1x256xf32>
    %c0_5 = arith.constant 0 : index
    %c0_6 = arith.constant 0 : index
    %3 = vector.load %arg5[%c0_5, %c0_6] : memref<16x128xf32, #tpu.memory_space<vmem>>, vector<16x128xf32>
    %c0_7 = arith.constant 0 : index
    %c0_8 = arith.constant 0 : index
    %4 = vector.load %arg6[%c0_7, %c0_8] : memref<128x128xf32, #tpu.memory_space<vmem>>, vector<128x128xf32>
    %c0_9 = arith.constant 0 : index
    %c0_10 = arith.constant 0 : index
    %5 = vector.load %arg7[%c0_9, %c0_10] : memref<1x128xf32, #tpu.memory_space<vmem>>, vector<1x128xf32>
    %c0_11 = arith.constant 0 : index
    %c0_12 = arith.constant 0 : index
    %6 = vector.load %arg1[%c0_11, %c0_12] : memref<256x128xf32, #tpu.memory_space<vmem>>, vector<128x128xf32>
    %cst = arith.constant dense<0.000000e+00> : vector<128x256xf32>
    %7 = tpu.matmul %6, %1, %cst {dimension_numbers = #tpu.dot_dimension_numbers<[1], [0], [0], [1], [0, 0, 1, 1], [], []>} : vector<128x128xf32>, vector<128x256xf32>, vector<128x256xf32> -> vector<128x256xf32>
    %cst_13 = arith.constant dense<0.000000e+00> : vector<128x256xf32>
    %8 = tpu.matmul %0, %7, %cst_13 {dimension_numbers = #tpu.dot_dimension_numbers<[1], [0], [0], [1], [0, 0, 1, 1], [], []>} : vector<128x128xf32>, vector<128x256xf32>, vector<128x256xf32> -> vector<128x256xf32>
    %9 = vector.broadcast %2 : vector<1x256xf32> to vector<128x256xf32>
    %10 = arith.addf %8, %9 : vector<128x256xf32>
    %11 = vector.extract_strided_slice %10 {offsets = [0, 0], sizes = [128, 128], strides = [1, 1]} : vector<128x256xf32> to vector<128x128xf32>
    %12 = arith.negf %11 : vector<128x128xf32>
    %13 = math.exp %12 : vector<128x128xf32>
    %cst_14 = arith.constant 1.000000e+00 : f32
    %14 = vector.broadcast %cst_14 : f32 to vector<128x128xf32>
    %15 = arith.addf %14, %13 : vector<128x128xf32>
    %16 = arith.divf %14, %15 : vector<128x128xf32>
    %17 = vector.extract_strided_slice %10 {offsets = [0, 128], sizes = [128, 128], strides = [1, 1]} : vector<128x256xf32> to vector<128x128xf32>
    %18 = math.tanh %17 : vector<128x128xf32>
    %cst_15 = arith.constant 1.000000e+00 : f32
    %19 = vector.broadcast %cst_15 : f32 to vector<128x128xf32>
    %20 = arith.subf %19, %16 : vector<128x128xf32>
    %21 = arith.mulf %20, %18 : vector<128x128xf32>
    %cst_16 = arith.constant dense<0.000000e+00> : vector<16x128xf32>
    %22 = tpu.matmul %3, %21, %cst_16 {dimension_numbers = #tpu.dot_dimension_numbers<[1], [0], [0], [1], [0, 0, 1, 1], [], []>} : vector<16x128xf32>, vector<128x128xf32>, vector<16x128xf32> -> vector<16x128xf32>
    %cst_17 = arith.constant 0.000000e+00 : f32
    %23 = vector.broadcast %cst_17 : f32 to vector<16x128xf32>
    %24 = arith.maximumf %22, %23 : vector<16x128xf32>
    %cst_18 = arith.constant dense<0.000000e+00> : vector<16x128xf32>
    %25 = tpu.matmul %24, %4, %cst_18 {dimension_numbers = #tpu.dot_dimension_numbers<[1], [0], [0], [1], [0, 0, 1, 1], [], []>} : vector<16x128xf32>, vector<128x128xf32>, vector<16x128xf32> -> vector<16x128xf32>
    %26 = vector.broadcast %5 : vector<1x128xf32> to vector<16x128xf32>
    %27 = arith.addf %25, %26 : vector<16x128xf32>
    %c0_19 = arith.constant 0 : index
    %c0_20 = arith.constant 0 : index
    %28 = vector.load %arg8[%c0_19, %c0_20] : memref<32x128xf32, #tpu.memory_space<vmem>>, vector<16x128xf32>
    tpu.vector_store %arg8[%c0_19, %c0_20], %27 {strides = array<i32>} : memref<32x128xf32, #tpu.memory_space<vmem>>, vector<16x128xf32>,
    %c128 = arith.constant 128 : index
    %c0_21 = arith.constant 0 : index
    %29 = vector.load %arg1[%c128, %c0_21] : memref<256x128xf32, #tpu.memory_space<vmem>>, vector<128x128xf32>
    %cst_22 = arith.constant dense<0.000000e+00> : vector<128x256xf32>
    %30 = tpu.matmul %29, %1, %cst_22 {dimension_numbers = #tpu.dot_dimension_numbers<[1], [0], [0], [1], [0, 0, 1, 1], [], []>} : vector<128x128xf32>, vector<128x256xf32>, vector<128x256xf32> -> vector<128x256xf32>
    %cst_23 = arith.constant dense<0.000000e+00> : vector<128x256xf32>
    %31 = tpu.matmul %0, %30, %cst_23 {dimension_numbers = #tpu.dot_dimension_numbers<[1], [0], [0], [1], [0, 0, 1, 1], [], []>} : vector<128x128xf32>, vector<128x256xf32>, vector<128x256xf32> -> vector<128x256xf32>
    %32 = vector.broadcast %2 : vector<1x256xf32> to vector<128x256xf32>
    %33 = arith.addf %31, %32 : vector<128x256xf32>
    %34 = vector.extract_strided_slice %33 {offsets = [0, 0], sizes = [128, 128], strides = [1, 1]} : vector<128x256xf32> to vector<128x128xf32>
    %35 = arith.negf %34 : vector<128x128xf32>
    %36 = math.exp %35 : vector<128x128xf32>
    %cst_24 = arith.constant 1.000000e+00 : f32
    %37 = vector.broadcast %cst_24 : f32 to vector<128x128xf32>
    %38 = arith.addf %37, %36 : vector<128x128xf32>
    %39 = arith.divf %37, %38 : vector<128x128xf32>
    %40 = vector.extract_strided_slice %33 {offsets = [0, 128], sizes = [128, 128], strides = [1, 1]} : vector<128x256xf32> to vector<128x128xf32>
    %41 = math.tanh %40 : vector<128x128xf32>
    %cst_25 = arith.constant 1.000000e+00 : f32
    %42 = vector.broadcast %cst_25 : f32 to vector<128x128xf32>
    %43 = arith.subf %42, %39 : vector<128x128xf32>
    %44 = arith.mulf %43, %41 : vector<128x128xf32>
    %cst_26 = arith.constant dense<0.000000e+00> : vector<16x128xf32>
    %45 = tpu.matmul %3, %44, %cst_26 {dimension_numbers = #tpu.dot_dimension_numbers<[1], [0], [0], [1], [0, 0, 1, 1], [], []>} : vector<16x128xf32>, vector<128x128xf32>, vector<16x128xf32> -> vector<16x128xf32>
    %cst_27 = arith.constant 0.000000e+00 : f32
    %46 = vector.broadcast %cst_27 : f32 to vector<16x128xf32>
    %47 = arith.maximumf %45, %46 : vector<16x128xf32>
    %cst_28 = arith.constant dense<0.000000e+00> : vector<16x128xf32>
    %48 = tpu.matmul %47, %4, %cst_28 {dimension_numbers = #tpu.dot_dimension_numbers<[1], [0], [0], [1], [0, 0, 1, 1], [], []>} : vector<16x128xf32>, vector<128x128xf32>, vector<16x128xf32> -> vector<16x128xf32>
    %49 = vector.broadcast %5 : vector<1x128xf32> to vector<16x128xf32>
    %50 = arith.addf %48, %49 : vector<16x128xf32>
    %c16 = arith.constant 16 : index
    %c0_29 = arith.constant 0 : index
    %51 = vector.load %arg8[%c16, %c0_29] : memref<32x128xf32, #tpu.memory_space<vmem>>, vector<16x128xf32>
    tpu.vector_store %arg8[%c16, %c0_29], %50 {strides = array<i32>} : memref<32x128xf32, #tpu.memory_space<vmem>>, vector<16x128xf32>,
    return
  }
  func.func @transform_0(%arg0: i32) -> (i32, i32) {
    %c0_i32 = arith.constant 0 : i32
    %c0_i32_0 = arith.constant 0 : i32
    return %arg0, %c0_i32 : i32, i32
  }
  func.func @transform_1(%arg0: i32) -> (i32, i32) {
    %c0_i32 = arith.constant 0 : i32
    %c0_i32_0 = arith.constant 0 : i32
    %c0_i32_1 = arith.constant 0 : i32
    return %c0_i32, %c0_i32_0 : i32, i32
  }
  func.func @transform_2(%arg0: i32) -> (i32, i32) {
    %c0_i32 = arith.constant 0 : i32
    %c0_i32_0 = arith.constant 0 : i32
    %c0_i32_1 = arith.constant 0 : i32
    return %c0_i32, %c0_i32_0 : i32, i32
  }
  func.func @transform_3(%arg0: i32) -> (i32, i32) {
    %c0_i32 = arith.constant 0 : i32
    %c0_i32_0 = arith.constant 0 : i32
    %c0_i32_1 = arith.constant 0 : i32
    return %c0_i32, %c0_i32_0 : i32, i32
  }
  func.func @transform_4(%arg0: i32) -> (i32, i32) {
    %c0_i32 = arith.constant 0 : i32
    %c0_i32_0 = arith.constant 0 : i32
    %c0_i32_1 = arith.constant 0 : i32
    return %c0_i32, %c0_i32_0 : i32, i32
  }
  func.func @transform_5(%arg0: i32) -> (i32, i32) {
    %c0_i32 = arith.constant 0 : i32
    %c0_i32_0 = arith.constant 0 : i32
    %c0_i32_1 = arith.constant 0 : i32
    return %c0_i32, %c0_i32_0 : i32, i32
  }
  func.func @transform_6(%arg0: i32) -> (i32, i32) {
    %c0_i32 = arith.constant 0 : i32
    %c0_i32_0 = arith.constant 0 : i32
    %c0_i32_1 = arith.constant 0 : i32
    return %c0_i32, %c0_i32_0 : i32, i32
  }
  func.func @transform_7(%arg0: i32) -> (i32, i32) {
    %c0_i32 = arith.constant 0 : i32
    %c0_i32_0 = arith.constant 0 : i32
    return %arg0, %c0_i32 : i32, i32
  }
}

</mosaic_0001>

<llo_original>
// kernel: temporal_gnn_forward.1
$region0: #{temporal_gnn_forward.1}
  #allocation0 [shape = 'u32[]', space=smem, size = 0x4, offset = 0x4, fixed_abs, tag = 'smem constant byte address 0x4 - core index']
  #allocation1 [shape = 'u32[72,128]{1,0:T(1,128)}', space=vmem, size = 0x9000, scoped, tag = 'internal scratch']
  %s0 = inlined_call_operand.vmem [shape: f32[256,128], index: 0, kind: input, shape index: {}]
  %s1 = inlined_call_operand.vmem [shape: f32[128,128], index: 1, kind: input, shape index: {}]
  %s2 = inlined_call_operand.vmem [shape: f32[128,256], index: 2, kind: input, shape index: {}]
  %s3 = inlined_call_operand.vmem [shape: f32[1,256], index: 3, kind: input, shape index: {}]
  %s4 = inlined_call_operand.vmem [shape: f32[16,128], index: 4, kind: input, shape index: {}]
  %s5 = inlined_call_operand.vmem [shape: f32[128,128], index: 5, kind: input, shape index: {}]
  %s6 = inlined_call_operand.vmem [shape: f32[1,128], index: 6, kind: input, shape index: {}]
  %s7 = inlined_call_operand.vmem [shape: f32[32,128], index: 7, kind: output, shape index: {}]
  %s8 = sld [smem:[#allocation0]]
  $region38: #{temporal_gnn_forward.1} parent=0
    _
  %s10 = ssub.s32 1, %s8
  %s11 = scalar_select 0, %s10, %s8
  // Predicated region
  $region2: #{temporal_gnn_forward.1} parent=0 // pred_check
    _
  $region3: #{temporal_gnn_forward.1} parent=0 // pred_check_branch
    %13 = sbr.rel (0) target = $region5
  $region4: #{temporal_gnn_forward.1} parent=0 // pred_region
    _
  $region5: #{temporal_gnn_forward.1} parent=0 // pred_fallthru
    _
  // Predicated region
  $region6: #{temporal_gnn_forward.1} parent=0 // pred_check
    _
  $region7: #{temporal_gnn_forward.1} parent=0 // pred_check_branch
    %15 = sbr.rel (0) target = $region9
  $region8: #{temporal_gnn_forward.1} parent=0 // pred_region
    _
  $region9: #{temporal_gnn_forward.1} parent=0 // pred_fallthru
    _
  // Predicated region
  $region10: #{temporal_gnn_forward.1} parent=0 // pred_check
    _
  $region11: #{temporal_gnn_forward.1} parent=0 // pred_check_branch
    %17 = sbr.rel (0) target = $region13
  $region12: #{temporal_gnn_forward.1} parent=0 // pred_region
    _
  $region13: #{temporal_gnn_forward.1} parent=0 // pred_fallthru
    _
  // Predicated region
  $region14: #{temporal_gnn_forward.1} parent=0 // pred_check
    _
  $region15: #{temporal_gnn_forward.1} parent=0 // pred_check_branch
    %19 = sbr.rel (0) target = $region17
  $region16: #{temporal_gnn_forward.1} parent=0 // pred_region
    _
  $region17: #{temporal_gnn_forward.1} parent=0 // pred_fallthru
    _
  // Predicated region
  $region18: #{temporal_gnn_forward.1} parent=0 // pred_check
    _
  $region19: #{temporal_gnn_forward.1} parent=0 // pred_check_branch
    %21 = sbr.rel (0) target = $region21
  $region20: #{temporal_gnn_forward.1} parent=0 // pred_region
    _
  $region21: #{temporal_gnn_forward.1} parent=0 // pred_fallthru
    _
  // Predicated region
  $region22: #{temporal_gnn_forward.1} parent=0 // pred_check
    _
  $region23: #{temporal_gnn_forward.1} parent=0 // pred_check_branch
    %23 = sbr.rel (0) target = $region25
  $region24: #{temporal_gnn_forward.1} parent=0 // pred_region
    _
  $region25: #{temporal_gnn_forward.1} parent=0 // pred_fallthru
    _
  // Predicated region
  $region26: #{temporal_gnn_forward.1} parent=0 // pred_check
    _
  $region27: #{temporal_gnn_forward.1} parent=0 // pred_check_branch
    %25 = sbr.rel (0) target = $region29
  $region28: #{temporal_gnn_forward.1} parent=0 // pred_region
    _
  $region29: #{temporal_gnn_forward.1} parent=0 // pred_fallthru
    _
  %v26 = vld [vmem:[%s1] sm:$0xff]
  %v27 = vld [vmem:[%s1 + $0x8] sm:$0xff]
  %v28 = vld [vmem:[%s1 + $0x10] sm:$0xff]
  %v29 = vld [vmem:[%s1 + $0x18] sm:$0xff]
  %v30 = vld [vmem:[%s1 + $0x20] sm:$0xff]
  %v31 = vld [vmem:[%s1 + $0x28] sm:$0xff]
  %v32 = vld [vmem:[%s1 + $0x30] sm:$0xff]
  %v33 = vld [vmem:[%s1 + $0x38] sm:$0xff]
  %v34 = vld [vmem:[%s1 + $0x40] sm:$0xff]
  %v35 = vld [vmem:[%s1 + $0x48] sm:$0xff]
  %v36 = vld [vmem:[%s1 + $0x50] sm:$0xff]
  %v37 = vld [vmem:[%s1 + $0x58] sm:$0xff]
  %v38 = vld [vmem:[%s1 + $0x60] sm:$0xff]
  %v39 = vld [vmem:[%s1 + $0x68] sm:$0xff]
  %v40 = vld [vmem:[%s1 + $0x70] sm:$0xff]
  %v41 = vld [vmem:[%s1 + $0x78] sm:$0xff]
  %v42 = vld [vmem:[%s2] sm:$0xff]
  %v43 = vld [vmem:[%s2 + $0x8] sm:$0xff]
  %v44 = vld [vmem:[%s2 + $0x10] sm:$0xff]
  %v45 = vld [vmem:[%s2 + $0x18] sm:$0xff]
  %v46 = vld [vmem:[%s2 + $0x20] sm:$0xff]
  %v47 = vld [vmem:[%s2 + $0x28] sm:$0xff]
  %v48 = vld [vmem:[%s2 + $0x30] sm:$0xff]
  %v49 = vld [vmem:[%s2 + $0x38] sm:$0xff]
  %v50 = vld [vmem:[%s2 + $0x40] sm:$0xff]
  %v51 = vld [vmem:[%s2 + $0x48] sm:$0xff]
  %v52 = vld [vmem:[%s2 + $0x50] sm:$0xff]
  %v53 = vld [vmem:[%s2 + $0x58] sm:$0xff]
  %v54 = vld [vmem:[%s2 + $0x60] sm:$0xff]
  %v55 = vld [vmem:[%s2 + $0x68] sm:$0xff]
  %v56 = vld [vmem:[%s2 + $0x70] sm:$0xff]
  %v57 = vld [vmem:[%s2 + $0x78] sm:$0xff]
  %v58 = vld [vmem:[%s2 + $0x80] sm:$0xff]
  %v59 = vld [vmem:[%s2 + $0x88] sm:$0xff]
  %v60 = vld [vmem:[%s2 + $0x90] sm:$0xff]
  %v61 = vld [vmem:[%s2 + $0x98] sm:$0xff]
  %v62 = vld [vmem:[%s2 + $0xa0] sm:$0xff]
  %v63 = vld [vmem:[%s2 + $0xa8] sm:$0xff]
  %v64 = vld [vmem:[%s2 + $0xb0] sm:$0xff]
  %v65 = vld [vmem:[%s2 + $0xb8] sm:$0xff]
  %v66 = vld [vmem:[%s2 + $0xc0] sm:$0xff]
  %v67 = vld [vmem:[%s2 + $0xc8] sm:$0xff]
  %v68 = vld [vmem:[%s2 + $0xd0] sm:$0xff]
  %v69 = vld [vmem:[%s2 + $0xd8] sm:$0xff]
  %v70 = vld [vmem:[%s2 + $0xe0] sm:$0xff]
  %v71 = vld [vmem:[%s2 + $0xe8] sm:$0xff]
  %v72 = vld [vmem:[%s2 + $0xf0] sm:$0xff]
  %v73 = vld [vmem:[%s2 + $0xf8] sm:$0xff]
  %v74 = vld [vmem:[%s3] sm:$0x3]
  %v75 = vld [vmem:[%s4] sm:$0xff]
  %v76 = vld [vmem:[%s4 + $0x8] sm:$0xff]
  %v77 = vld [vmem:[%s5] sm:$0xff]
  %v78 = vld [vmem:[%s5 + $0x8] sm:$0xff]
  %v79 = vld [vmem:[%s5 + $0x10] sm:$0xff]
  %v80 = vld [vmem:[%s5 + $0x18] sm:$0xff]
  %v81 = vld [vmem:[%s5 + $0x20] sm:$0xff]
  %v82 = vld [vmem:[%s5 + $0x28] sm:$0xff]
  %v83 = vld [vmem:[%s5 + $0x30] sm:$0xff]
  %v84 = vld [vmem:[%s5 + $0x38] sm:$0xff]
  %v85 = vld [vmem:[%s5 + $0x40] sm:$0xff]
  %v86 = vld [vmem:[%s5 + $0x48] sm:$0xff]
  %v87 = vld [vmem:[%s5 + $0x50] sm:$0xff]
  %v88 = vld [vmem:[%s5 + $0x58] sm:$0xff]
  %v89 = vld [vmem:[%s5 + $0x60] sm:$0xff]
  %v90 = vld [vmem:[%s5 + $0x68] sm:$0xff]
  %v91 = vld [vmem:[%s5 + $0x70] sm:$0xff]
  %v92 = vld [vmem:[%s5 + $0x78] sm:$0xff]
  %v93 = vld [vmem:[%s6] sm:$0x1]
  %v94 = vld [vmem:[%s0] sm:$0xff]
  %v95 = vld [vmem:[%s0 + $0x8] sm:$0xff]
  %v96 = vld [vmem:[%s0 + $0x10] sm:$0xff]
  %v97 = vld [vmem:[%s0 + $0x18] sm:$0xff]
  %v98 = vld [vmem:[%s0 + $0x20] sm:$0xff]
  %v99 = vld [vmem:[%s0 + $0x28] sm:$0xff]
  %v100 = vld [vmem:[%s0 + $0x30] sm:$0xff]
  %v101 = vld [vmem:[%s0 + $0x38] sm:$0xff]
  %v102 = vld [vmem:[%s0 + $0x40] sm:$0xff]
  %v103 = vld [vmem:[%s0 + $0x48] sm:$0xff]
  %v104 = vld [vmem:[%s0 + $0x50] sm:$0xff]
  %v105 = vld [vmem:[%s0 + $0x58] sm:$0xff]
  %v106 = vld [vmem:[%s0 + $0x60] sm:$0xff]
  %v107 = vld [vmem:[%s0 + $0x68] sm:$0xff]
  %v108 = vld [vmem:[%s0 + $0x70] sm:$0xff]
  %v109 = vld [vmem:[%s0 + $0x78] sm:$0xff]
  %110 = vmatpush.msra.mxu0 %v72
  %111 = vmatpush.msra.mxu0 %v70
  %112 = vmatpush.msra.mxu0 %v68
  %113 = vmatpush.msra.mxu0 %v66
  %114 = vmatpush.msra.mxu0 %v64
  %115 = vmatpush.msra.mxu0 %v62
  %116 = vmatpush.msra.mxu0 %v60
  %117 = vmatpush.msra.mxu0 %v58
  %118 = vmatpush.msra.mxu0 %v56
  %119 = vmatpush.msra.mxu0 %v54
  %120 = vmatpush.msra.mxu0 %v52
  %121 = vmatpush.msra.mxu0 %v50
  %122 = vmatpush.msra.mxu0 %v48
  %123 = vmatpush.msra.mxu0 %v46
  %124 = vmatpush.msra.mxu0 %v44
  %125 = vmatpush.msra.mxu0 %v42
  %126 = vmatmul.f32.gmra.mxu0 %v94
  %v127 = vpop.f32.mrf.mxu0
  %v128 = vadd.f32 0.0, %v127
  %129 = vmatmul.f32.gmra.mxu0 %v95
  %v130 = vpop.f32.mrf.mxu0
  %v131 = vadd.f32 0.0, %v130
  %132 = vmatmul.f32.gmra.mxu0 %v96
  %v133 = vpop.f32.mrf.mxu0
  %v134 = vadd.f32 0.0, %v133
  %135 = vmatmul.f32.gmra.mxu0 %v97
  %v136 = vpop.f32.mrf.mxu0
  %v137 = vadd.f32 0.0, %v136
  %138 = vmatmul.f32.gmra.mxu0 %v98
  %v139 = vpop.f32.mrf.mxu0
  %v140 = vadd.f32 0.0, %v139
  %141 = vmatmul.f32.gmra.mxu0 %v99
  %v142 = vpop.f32.mrf.mxu0
  %v143 = vadd.f32 0.0, %v142
  %144 = vmatmul.f32.gmra.mxu0 %v100
  %v145 = vpop.f32.mrf.mxu0
  %v146 = vadd.f32 0.0, %v145
  %147 = vmatmul.f32.gmra.mxu0 %v101
  %v148 = vpop.f32.mrf.mxu0
  %v149 = vadd.f32 0.0, %v148
  %150 = vmatmul.f32.gmra.mxu0 %v102
  %v151 = vpop.f32.mrf.mxu0
  %v152 = vadd.f32 0.0, %v151
  %153 = vmatmul.f32.gmra.mxu0 %v103
  %v154 = vpop.f32.mrf.mxu0
  %v155 = vadd.f32 0.0, %v154
  %156 = vmatmul.f32.gmra.mxu0 %v104
  %v157 = vpop.f32.mrf.mxu0
  %v158 = vadd.f32 0.0, %v157
  %159 = vmatmul.f32.gmra.mxu0 %v105
  %v160 = vpop.f32.mrf.mxu0
  %v161 = vadd.f32 0.0, %v160
  %162 = vmatmul.f32.gmra.mxu0 %v106
  %v163 = vpop.f32.mrf.mxu0
  %v164 = vadd.f32 0.0, %v163
  %165 = vmatmul.f32.gmra.mxu0 %v107
  %v166 = vpop.f32.mrf.mxu0
  %v167 = vadd.f32 0.0, %v166
  %168 = vmatmul.f32.gmra.mxu0 %v108
  %v169 = vpop.f32.mrf.mxu0
  %v170 = vadd.f32 0.0, %v169
  %171 = vmatmul.f32.gmra.mxu0 %v109
  %v172 = vpop.f32.mrf.mxu0
  %v173 = vadd.f32 0.0, %v172
  %174 = vdwg.mxu0
  %175 = vmatpush.msra.mxu0 %v73
  %176 = vmatpush.msra.mxu0 %v71
  %177 = vmatpush.msra.mxu0 %v69
  %178 = vmatpush.msra.mxu0 %v67
  %179 = vmatpush.msra.mxu0 %v65
  %180 = vmatpush.msra.mxu0 %v63
  %181 = vmatpush.msra.mxu0 %v61
  %182 = vmatpush.msra.mxu0 %v59
  %183 = vmatpush.msra.mxu0 %v57
  %184 = vmatpush.msra.mxu0 %v55
  %185 = vmatpush.msra.mxu0 %v53
  %186 = vmatpush.msra.mxu0 %v51
  %187 = vmatpush.msra.mxu0 %v49
  %188 = vmatpush.msra.mxu0 %v47
  %189 = vmatpush.msra.mxu0 %v45
  %190 = vmatpush.msra.mxu0 %v43
  %191 = vmatmul.f32.gmra.mxu0 %v94
  %v192 = vpop.f32.mrf.mxu0
  %v193 = vadd.f32 0.0, %v192
  %194 = vmatmul.f32.gmra.mxu0 %v95
  %v195 = vpop.f32.mrf.mxu0
  %v196 = vadd.f32 0.0, %v195
  %197 = vmatmul.f32.gmra.mxu0 %v96
  %v198 = vpop.f32.mrf.mxu0
  %v199 = vadd.f32 0.0, %v198
  %200 = vmatmul.f32.gmra.mxu0 %v97
  %v201 = vpop.f32.mrf.mxu0
  %v202 = vadd.f32 0.0, %v201
  %203 = vmatmul.f32.gmra.mxu0 %v98
  %v204 = vpop.f32.mrf.mxu0
  %v205 = vadd.f32 0.0, %v204
  %206 = vmatmul.f32.gmra.mxu0 %v99
  %v207 = vpop.f32.mrf.mxu0
  %v208 = vadd.f32 0.0, %v207
  %209 = vmatmul.f32.gmra.mxu0 %v100
  %v210 = vpop.f32.mrf.mxu0
  %v211 = vadd.f32 0.0, %v210
  %212 = vmatmul.f32.gmra.mxu0 %v101
  %v213 = vpop.f32.mrf.mxu0
  %v214 = vadd.f32 0.0, %v213
  %215 = vmatmul.f32.gmra.mxu0 %v102
  %v216 = vpop.f32.mrf.mxu0
  %v217 = vadd.f32 0.0, %v216
  %218 = vmatmul.f32.gmra.mxu0 %v103
  %v219 = vpop.f32.mrf.mxu0
  %v220 = vadd.f32 0.0, %v219
  %221 = vmatmul.f32.gmra.mxu0 %v104
  %v222 = vpop.f32.mrf.mxu0
  %v223 = vadd.f32 0.0, %v222
  %224 = vmatmul.f32.gmra.mxu0 %v105
  %v225 = vpop.f32.mrf.mxu0
  %v226 = vadd.f32 0.0, %v225
  %227 = vmatmul.f32.gmra.mxu0 %v106
  %v228 = vpop.f32.mrf.mxu0
  %v229 = vadd.f32 0.0, %v228
  %230 = vmatmul.f32.gmra.mxu0 %v107
  %v231 = vpop.f32.mrf.mxu0
  %v232 = vadd.f32 0.0, %v231
  %233 = vmatmul.f32.gmra.mxu0 %v108
  %v234 = vpop.f32.mrf.mxu0
  %v235 = vadd.f32 0.0, %v234
  %236 = vmatmul.f32.gmra.mxu0 %v109
  %v237 = vpop.f32.mrf.mxu0
  %v238 = vadd.f32 0.0, %v237
  %239 = vdwg.mxu0
  %v241 = vperm.slane %v74, 0
  %v242 = vperm.slane %v74, 1
  %245 = vmatpush.msra.mxu0 %v173
  %246 = vmatpush.msra.mxu0 %v170
  %247 = vmatpush.msra.mxu0 %v167
  %248 = vmatpush.msra.mxu0 %v164
  %249 = vmatpush.msra.mxu0 %v161
  %250 = vmatpush.msra.mxu0 %v158
  %251 = vmatpush.msra.mxu0 %v155
  %252 = vmatpush.msra.mxu0 %v152
  %253 = vmatpush.msra.mxu0 %v149
  %254 = vmatpush.msra.mxu0 %v146
  %255 = vmatpush.msra.mxu0 %v143
  %256 = vmatpush.msra.mxu0 %v140
  %257 = vmatpush.msra.mxu0 %v137
  %258 = vmatpush.msra.mxu0 %v134
  %259 = vmatpush.msra.mxu0 %v131
  %260 = vmatpush.msra.mxu0 %v128
  %261 = vmatmul.f32.gmra.mxu0 %v26
  %v262 = vpop.f32.mrf.mxu0
  %v263 = vadd.f32 %v241, %v262
  %264 = vmatmul.f32.gmra.mxu0 %v27
  %v265 = vpop.f32.mrf.mxu0
  %v266 = vadd.f32 %v241, %v265
  %267 = vmatmul.f32.gmra.mxu0 %v28
  %v268 = vpop.f32.mrf.mxu0
  %v269 = vadd.f32 %v241, %v268
  %270 = vmatmul.f32.gmra.mxu0 %v29
  %v271 = vpop.f32.mrf.mxu0
  %v272 = vadd.f32 %v241, %v271
  %273 = vmatmul.f32.gmra.mxu0 %v30
  %v274 = vpop.f32.mrf.mxu0
  %v275 = vadd.f32 %v241, %v274
  %276 = vmatmul.f32.gmra.mxu0 %v31
  %v277 = vpop.f32.mrf.mxu0
  %v278 = vadd.f32 %v241, %v277
  %279 = vmatmul.f32.gmra.mxu0 %v32
  %v280 = vpop.f32.mrf.mxu0
  %v281 = vadd.f32 %v241, %v280
  %282 = vmatmul.f32.gmra.mxu0 %v33
  %v283 = vpop.f32.mrf.mxu0
  %v284 = vadd.f32 %v241, %v283
  %285 = vmatmul.f32.gmra.mxu0 %v34
  %v286 = vpop.f32.mrf.mxu0
  %v287 = vadd.f32 %v241, %v286
  %288 = vmatmul.f32.gmra.mxu0 %v35
  %v289 = vpop.f32.mrf.mxu0
  %v290 = vadd.f32 %v241, %v289
  %291 = vmatmul.f32.gmra.mxu0 %v36
  %v292 = vpop.f32.mrf.mxu0
  %v293 = vadd.f32 %v241, %v292
  %294 = vmatmul.f32.gmra.mxu0 %v37
  %v295 = vpop.f32.mrf.mxu0
  %v296 = vadd.f32 %v241, %v295
  %297 = vmatmul.f32.gmra.mxu0 %v38
  %v298 = vpop.f32.mrf.mxu0
  %v299 = vadd.f32 %v241, %v298
  %300 = vmatmul.f32.gmra.mxu0 %v39
  %v301 = vpop.f32.mrf.mxu0
  %v302 = vadd.f32 %v241, %v301
  %303 = vmatmul.f32.gmra.mxu0 %v40
  %v304 = vpop.f32.mrf.mxu0
  %v305 = vadd.f32 %v241, %v304
  %306 = vmatmul.f32.gmra.mxu0 %v41
  %v307 = vpop.f32.mrf.mxu0
  %v308 = vadd.f32 %v241, %v307
  %309 = vdwg.mxu0
  %310 = vmatpush.msra.mxu0 %v238
  %311 = vmatpush.msra.mxu0 %v235
  %312 = vmatpush.msra.mxu0 %v232
  %313 = vmatpush.msra.mxu0 %v229
  %314 = vmatpush.msra.mxu0 %v226
  %315 = vmatpush.msra.mxu0 %v223
  %316 = vmatpush.msra.mxu0 %v220
  %317 = vmatpush.msra.mxu0 %v217
  %318 = vmatpush.msra.mxu0 %v214
  %319 = vmatpush.msra.mxu0 %v211
  %320 = vmatpush.msra.mxu0 %v208
  %321 = vmatpush.msra.mxu0 %v205
  %322 = vmatpush.msra.mxu0 %v202
  %323 = vmatpush.msra.mxu0 %v199
  %324 = vmatpush.msra.mxu0 %v196
  %325 = vmatpush.msra.mxu0 %v193
  %326 = vmatmul.f32.gmra.mxu0 %v26
  %v327 = vpop.f32.mrf.mxu0
  %v328 = vadd.f32 %v242, %v327
  %329 = vmatmul.f32.gmra.mxu0 %v27
  %v330 = vpop.f32.mrf.mxu0
  %v331 = vadd.f32 %v242, %v330
  %332 = vmatmul.f32.gmra.mxu0 %v28
  %v333 = vpop.f32.mrf.mxu0
  %v334 = vadd.f32 %v242, %v333
  %335 = vmatmul.f32.gmra.mxu0 %v29
  %v336 = vpop.f32.mrf.mxu0
  %v337 = vadd.f32 %v242, %v336
  %338 = vmatmul.f32.gmra.mxu0 %v30
  %v339 = vpop.f32.mrf.mxu0
  %v340 = vadd.f32 %v242, %v339
  %341 = vmatmul.f32.gmra.mxu0 %v31
  %v342 = vpop.f32.mrf.mxu0
  %v343 = vadd.f32 %v242, %v342
  %344 = vmatmul.f32.gmra.mxu0 %v32
  %v345 = vpop.f32.mrf.mxu0
  %v346 = vadd.f32 %v242, %v345
  %347 = vmatmul.f32.gmra.mxu0 %v33
  %v348 = vpop.f32.mrf.mxu0
  %v349 = vadd.f32 %v242, %v348
  %350 = vmatmul.f32.gmra.mxu0 %v34
  %v351 = vpop.f32.mrf.mxu0
  %v352 = vadd.f32 %v242, %v351
  %353 = vmatmul.f32.gmra.mxu0 %v35
  %v354 = vpop.f32.mrf.mxu0
  %v355 = vadd.f32 %v242, %v354
  %356 = vmatmul.f32.gmra.mxu0 %v36
  %v357 = vpop.f32.mrf.mxu0
  %v358 = vadd.f32 %v242, %v357
  %359 = vmatmul.f32.gmra.mxu0 %v37
  %v360 = vpop.f32.mrf.mxu0
  %v361 = vadd.f32 %v242, %v360
  %362 = vmatmul.f32.gmra.mxu0 %v38
  %v363 = vpop.f32.mrf.mxu0
  %v364 = vadd.f32 %v242, %v363
  %365 = vmatmul.f32.gmra.mxu0 %v39
  %v366 = vpop.f32.mrf.mxu0
  %v367 = vadd.f32 %v242, %v366
  %368 = vmatmul.f32.gmra.mxu0 %v40
  %v369 = vpop.f32.mrf.mxu0
  %v370 = vadd.f32 %v242, %v369
  %371 = vmatmul.f32.gmra.mxu0 %v41
  %v372 = vpop.f32.mrf.mxu0
  %v373 = vadd.f32 %v242, %v372
  %374 = vdwg.mxu0
  %v375 = vxor.u32 %v263, 2147483648
  %v376 = vxor.u32 %v266, 2147483648
  %v377 = vxor.u32 %v269, 2147483648
  %v378 = vxor.u32 %v272, 2147483648
  %v379 = vxor.u32 %v275, 2147483648
  %v380 = vxor.u32 %v278, 2147483648
  %v381 = vxor.u32 %v281, 2147483648
  %v382 = vxor.u32 %v284, 2147483648
  %v383 = vxor.u32 %v287, 2147483648
  %v384 = vxor.u32 %v290, 2147483648
  %v385 = vxor.u32 %v293, 2147483648
  %v386 = vxor.u32 %v296, 2147483648
  %v387 = vxor.u32 %v299, 2147483648
  %v388 = vxor.u32 %v302, 2147483648
  %v389 = vxor.u32 %v305, 2147483648
  %v390 = vxor.u32 %v308, 2147483648
  %v391 = vmul.f32 %v375, 1.442695
  %v392 = vpow.pop %v391
  %v393 = vmul.f32 %v376, 1.442695
  %v394 = vpow.pop %v393
  %v395 = vmul.f32 %v377, 1.442695
  %v396 = vpow.pop %v395
  %v397 = vmul.f32 %v378, 1.442695
  %v398 = vpow.pop %v397
  %v399 = vmul.f32 %v379, 1.442695
  %v400 = vpow.pop %v399
  %v401 = vmul.f32 %v380, 1.442695
  %v402 = vpow.pop %v401
  %v403 = vmul.f32 %v381, 1.442695
  %v404 = vpow.pop %v403
  %v405 = vmul.f32 %v382, 1.442695
  %v406 = vpow.pop %v405
  %v407 = vmul.f32 %v383, 1.442695
  %v408 = vpow.pop %v407
  %v409 = vmul.f32 %v384, 1.442695
  %v410 = vpow.pop %v409
  %v411 = vmul.f32 %v385, 1.442695
  %v412 = vpow.pop %v411
  %v413 = vmul.f32 %v386, 1.442695
  %v414 = vpow.pop %v413
  %v415 = vmul.f32 %v387, 1.442695
  %v416 = vpow.pop %v415
  %v417 = vmul.f32 %v388, 1.442695
  %v418 = vpow.pop %v417
  %v419 = vmul.f32 %v389, 1.442695
  %v420 = vpow.pop %v419
  %v421 = vmul.f32 %v390, 1.442695
  %v422 = vpow.pop %v421
  %v423 = vadd.f32 %v392, 1.0
  %v424 = vadd.f32 %v394, 1.0
  %v425 = vadd.f32 %v396, 1.0
  %v426 = vadd.f32 %v398, 1.0
  %v427 = vadd.f32 %v400, 1.0
  %v428 = vadd.f32 %v402, 1.0
  %v429 = vadd.f32 %v404, 1.0
  %v430 = vadd.f32 %v406, 1.0
  %v431 = vadd.f32 %v408, 1.0
  %v432 = vadd.f32 %v410, 1.0
  %v433 = vadd.f32 %v412, 1.0
  %v434 = vadd.f32 %v414, 1.0
  %v435 = vadd.f32 %v416, 1.0
  %v436 = vadd.f32 %v418, 1.0
  %v437 = vadd.f32 %v420, 1.0
  %v438 = vadd.f32 %v422, 1.0
  %v439 = vrcp.pop %v423
  %v440 = vmul.f32 %v423, %v439
  %v441 = vsub.f32 1.0, %v440
  %v442 = vmul.f32 %v439, %v441
  %v443 = vadd.f32 %v439, %v442
  %vm444 = vweird.f32 %v423
  %vm445 = vweird.f32 %v439
  %vm446 = vmor %vm444, %vm445
  %v447 = vsel %vm446, %v439, %v443
  %v448 = vand.u32 2147483647, %v423
  %vm449 = vcmp.eq.f32.partialorder %v448, 8.507059e+37
  %v450 = vand.u32 %v423, 2147483648
  %v451 = vor.u32 1.1754944e-38, %v450
  %v452 = vsel %vm449, %v451, %v447
  %v453 = vmul.f32 1.0, %v452
  %v454 = vrcp.pop %v424
  %v455 = vmul.f32 %v424, %v454
  %v456 = vsub.f32 1.0, %v455
  %v457 = vmul.f32 %v454, %v456
  %v458 = vadd.f32 %v454, %v457
  %vm459 = vweird.f32 %v424
  %vm460 = vweird.f32 %v454
  %vm461 = vmor %vm459, %vm460
  %v462 = vsel %vm461, %v454, %v458
  %v463 = vand.u32 2147483647, %v424
  %vm464 = vcmp.eq.f32.partialorder %v463, 8.507059e+37
  %v465 = vand.u32 %v424, 2147483648
  %v466 = vor.u32 1.1754944e-38, %v465
  %v467 = vsel %vm464, %v466, %v462
  %v468 = vmul.f32 1.0, %v467
  %v469 = vrcp.pop %v425
  %v470 = vmul.f32 %v425, %v469
  %v471 = vsub.f32 1.0, %v470
  %v472 = vmul.f32 %v469, %v471
  %v473 = vadd.f32 %v469, %v472
  %vm474 = vweird.f32 %v425
  %vm475 = vweird.f32 %v469
  %vm476 = vmor %vm474, %vm475
  %v477 = vsel %vm476, %v469, %v473
  %v478 = vand.u32 2147483647, %v425
  %vm479 = vcmp.eq.f32.partialorder %v478, 8.507059e+37
  %v480 = vand.u32 %v425, 2147483648
  %v481 = vor.u32 1.1754944e-38, %v480
  %v482 = vsel %vm479, %v481, %v477
  %v483 = vmul.f32 1.0, %v482
  %v484 = vrcp.pop %v426
  %v485 = vmul.f32 %v426, %v484
  %v486 = vsub.f32 1.0, %v485
  %v487 = vmul.f32 %v484, %v486
  %v488 = vadd.f32 %v484, %v487
  %vm489 = vweird.f32 %v426
  %vm490 = vweird.f32 %v484
  %vm491 = vmor %vm489, %vm490
  %v492 = vsel %vm491, %v484, %v488
  %v493 = vand.u32 2147483647, %v426
  %vm494 = vcmp.eq.f32.partialorder %v493, 8.507059e+37
  %v495 = vand.u32 %v426, 2147483648
  %v496 = vor.u32 1.1754944e-38, %v495
  %v497 = vsel %vm494, %v496, %v492
  %v498 = vmul.f32 1.0, %v497
  %v499 = vrcp.pop %v427
  %v500 = vmul.f32 %v427, %v499
  %v501 = vsub.f32 1.0, %v500
  %v502 = vmul.f32 %v499, %v501
  %v503 = vadd.f32 %v499, %v502
  %vm504 = vweird.f32 %v427
  %vm505 = vweird.f32 %v499
  %vm506 = vmor %vm504, %vm505
  %v507 = vsel %vm506, %v499, %v503
  %v508 = vand.u32 2147483647, %v427
  %vm509 = vcmp.eq.f32.partialorder %v508, 8.507059e+37
  %v510 = vand.u32 %v427, 2147483648
  %v511 = vor.u32 1.1754944e-38, %v510
  %v512 = vsel %vm509, %v511, %v507
  %v513 = vmul.f32 1.0, %v512
  %v514 = vrcp.pop %v428
  %v515 = vmul.f32 %v428, %v514
  %v516 = vsub.f32 1.0, %v515
  %v517 = vmul.f32 %v514, %v516
  %v518 = vadd.f32 %v514, %v517
  %vm519 = vweird.f32 %v428
  %vm520 = vweird.f32 %v514
  %vm521 = vmor %vm519, %vm520
  %v522 = vsel %vm521, %v514, %v518
  %v523 = vand.u32 2147483647, %v428
  %vm524 = vcmp.eq.f32.partialorder %v523, 8.507059e+37
  %v525 = vand.u32 %v428, 2147483648
  %v526 = vor.u32 1.1754944e-38, %v525
  %v527 = vsel %vm524, %v526, %v522
  %v528 = vmul.f32 1.0, %v527
  %v529 = vrcp.pop %v429
  %v530 = vmul.f32 %v429, %v529
  %v531 = vsub.f32 1.0, %v530
  %v532 = vmul.f32 %v529, %v531
  %v533 = vadd.f32 %v529, %v532
  %vm534 = vweird.f32 %v429
  %vm535 = vweird.f32 %v529
  %vm536 = vmor %vm534, %vm535
  %v537 = vsel %vm536, %v529, %v533
  %v538 = vand.u32 2147483647, %v429
  %vm539 = vcmp.eq.f32.partialorder %v538, 8.507059e+37
  %v540 = vand.u32 %v429, 2147483648
  %v541 = vor.u32 1.1754944e-38, %v540
  %v542 = vsel %vm539, %v541, %v537
  %v543 = vmul.f32 1.0, %v542
  %v544 = vrcp.pop %v430
  %v545 = vmul.f32 %v430, %v544
  %v546 = vsub.f32 1.0, %v545
  %v547 = vmul.f32 %v544, %v546
  %v548 = vadd.f32 %v544, %v547
  %vm549 = vweird.f32 %v430
  %vm550 = vweird.f32 %v544
  %vm551 = vmor %vm549, %vm550
  %v552 = vsel %vm551, %v544, %v548
  %v553 = vand.u32 2147483647, %v430
  %vm554 = vcmp.eq.f32.partialorder %v553, 8.507059e+37
  %v555 = vand.u32 %v430, 2147483648
  %v556 = vor.u32 1.1754944e-38, %v555
  %v557 = vsel %vm554, %v556, %v552
  %v558 = vmul.f32 1.0, %v557
  %v559 = vrcp.pop %v431
  %v560 = vmul.f32 %v431, %v559
  %v561 = vsub.f32 1.0, %v560
  %v562 = vmul.f32 %v559, %v561
  %v563 = vadd.f32 %v559, %v562
  %vm564 = vweird.f32 %v431
  %vm565 = vweird.f32 %v559
  %vm566 = vmor %vm564, %vm565
  %v567 = vsel %vm566, %v559, %v563
  %v568 = vand.u32 2147483647, %v431
  %vm569 = vcmp.eq.f32.partialorder %v568, 8.507059e+37
  %v570 = vand.u32 %v431, 2147483648
  %v571 = vor.u32 1.1754944e-38, %v570
  %v572 = vsel %vm569, %v571, %v567
  %v573 = vmul.f32 1.0, %v572
  %v574 = vrcp.pop %v432
  %v575 = vmul.f32 %v432, %v574
  %v576 = vsub.f32 1.0, %v575
  %v577 = vmul.f32 %v574, %v576
  %v578 = vadd.f32 %v574, %v577
  %vm579 = vweird.f32 %v432
  %vm580 = vweird.f32 %v574
  %vm581 = vmor %vm579, %vm580
  %v582 = vsel %vm581, %v574, %v578
  %v583 = vand.u32 2147483647, %v432
  %vm584 = vcmp.eq.f32.partialorder %v583, 8.507059e+37
  %v585 = vand.u32 %v432, 2147483648
  %v586 = vor.u32 1.1754944e-38, %v585
  %v587 = vsel %vm584, %v586, %v582
  %v588 = vmul.f32 1.0, %v587
  %v589 = vrcp.pop %v433
  %v590 = vmul.f32 %v433, %v589
  %v591 = vsub.f32 1.0, %v590
  %v592 = vmul.f32 %v589, %v591
  %v593 = vadd.f32 %v589, %v592
  %vm594 = vweird.f32 %v433
  %vm595 = vweird.f32 %v589
  %vm596 = vmor %vm594, %vm595
  %v597 = vsel %vm596, %v589, %v593
  %v598 = vand.u32 2147483647, %v433
  %vm599 = vcmp.eq.f32.partialorder %v598, 8.507059e+37
  %v600 = vand.u32 %v433, 2147483648
  %v601 = vor.u32 1.1754944e-38, %v600
  %v602 = vsel %vm599, %v601, %v597
  %v603 = vmul.f32 1.0, %v602
  %v604 = vrcp.pop %v434
  %v605 = vmul.f32 %v434, %v604
  %v606 = vsub.f32 1.0, %v605
  %v607 = vmul.f32 %v604, %v606
  %v608 = vadd.f32 %v604, %v607
  %vm609 = vweird.f32 %v434
  %vm610 = vweird.f32 %v604
  %vm611 = vmor %vm609, %vm610
  %v612 = vsel %vm611, %v604, %v608
  %v613 = vand.u32 2147483647, %v434
  %vm614 = vcmp.eq.f32.partialorder %v613, 8.507059e+37
  %v615 = vand.u32 %v434, 2147483648
  %v616 = vor.u32 1.1754944e-38, %v615
  %v617 = vsel %vm614, %v616, %v612
  %v618 = vmul.f32 1.0, %v617
  %v619 = vrcp.pop %v435
  %v620 = vmul.f32 %v435, %v619
  %v621 = vsub.f32 1.0, %v620
  %v622 = vmul.f32 %v619, %v621
  %v623 = vadd.f32 %v619, %v622
  %vm624 = vweird.f32 %v435
  %vm625 = vweird.f32 %v619
  %vm626 = vmor %vm624, %vm625
  %v627 = vsel %vm626, %v619, %v623
  %v628 = vand.u32 2147483647, %v435
  %vm629 = vcmp.eq.f32.partialorder %v628, 8.507059e+37
  %v630 = vand.u32 %v435, 2147483648
  %v631 = vor.u32 1.1754944e-38, %v630
  %v632 = vsel %vm629, %v631, %v627
  %v633 = vmul.f32 1.0, %v632
  %v634 = vrcp.pop %v436
  %v635 = vmul.f32 %v436, %v634
  %v636 = vsub.f32 1.0, %v635
  %v637 = vmul.f32 %v634, %v636
  %v638 = vadd.f32 %v634, %v637
  %vm639 = vweird.f32 %v436
  %vm640 = vweird.f32 %v634
  %vm641 = vmor %vm639, %vm640
  %v642 = vsel %vm641, %v634, %v638
  %v643 = vand.u32 2147483647, %v436
  %vm644 = vcmp.eq.f32.partialorder %v643, 8.507059e+37
  %v645 = vand.u32 %v436, 2147483648
  %v646 = vor.u32 1.1754944e-38, %v645
  %v647 = vsel %vm644, %v646, %v642
  %v648 = vmul.f32 1.0, %v647
  %v649 = vrcp.pop %v437
  %v650 = vmul.f32 %v437, %v649
  %v651 = vsub.f32 1.0, %v650
  %v652 = vmul.f32 %v649, %v651
  %v653 = vadd.f32 %v649, %v652
  %vm654 = vweird.f32 %v437
  %vm655 = vweird.f32 %v649
  %vm656 = vmor %vm654, %vm655
  %v657 = vsel %vm656, %v649, %v653
  %v658 = vand.u32 2147483647, %v437
  %vm659 = vcmp.eq.f32.partialorder %v658, 8.507059e+37
  %v660 = vand.u32 %v437, 2147483648
  %v661 = vor.u32 1.1754944e-38, %v660
  %v662 = vsel %vm659, %v661, %v657
  %v663 = vmul.f32 1.0, %v662
  %v664 = vrcp.pop %v438
  %v665 = vmul.f32 %v438, %v664
  %v666 = vsub.f32 1.0, %v665
  %v667 = vmul.f32 %v664, %v666
  %v668 = vadd.f32 %v664, %v667
  %vm669 = vweird.f32 %v438
  %vm670 = vweird.f32 %v664
  %vm671 = vmor %vm669, %vm670
  %v672 = vsel %vm671, %v664, %v668
  %v673 = vand.u32 2147483647, %v438
  %vm674 = vcmp.eq.f32.partialorder %v673, 8.507059e+37
  %v675 = vand.u32 %v438, 2147483648
  %v676 = vor.u32 1.1754944e-38, %v675
  %v677 = vsel %vm674, %v676, %v672
  %v678 = vmul.f32 1.0, %v677
  %v679 = vtanh.pop %v328
  %v680 = vtanh.pop %v331
  %v681 = vtanh.pop %v334
  %v682 = vtanh.pop %v337
  %v683 = vtanh.pop %v340
  %v684 = vtanh.pop %v343
  %v685 = vtanh.pop %v346
  %v686 = vtanh.pop %v349
  %v687 = vtanh.pop %v352
  %v688 = vtanh.pop %v355
  %v689 = vtanh.pop %v358
  %v690 = vtanh.pop %v361
  %v691 = vtanh.pop %v364
  %v692 = vtanh.pop %v367
  %v693 = vtanh.pop %v370
  %v694 = vtanh.pop %v373
  %v695 = vsub.f32 1.0, %v453
  %v696 = vsub.f32 1.0, %v468
  %v697 = vsub.f32 1.0, %v483
  %v698 = vsub.f32 1.0, %v498
  %v699 = vsub.f32 1.0, %v513
  %v700 = vsub.f32 1.0, %v528
  %v701 = vsub.f32 1.0, %v543
  %v702 = vsub.f32 1.0, %v558
  %v703 = vsub.f32 1.0, %v573
  %v704 = vsub.f32 1.0, %v588
  %v705 = vsub.f32 1.0, %v603
  %v706 = vsub.f32 1.0, %v618
  %v707 = vsub.f32 1.0, %v633
  %v708 = vsub.f32 1.0, %v648
  %v709 = vsub.f32 1.0, %v663
  %v710 = vsub.f32 1.0, %v678
  %v711 = vmul.f32 %v695, %v679
  %v712 = vmul.f32 %v696, %v680
  %v713 = vmul.f32 %v697, %v681
  %v714 = vmul.f32 %v698, %v682
  %v715 = vmul.f32 %v699, %v683
  %v716 = vmul.f32 %v700, %v684
  %v717 = vmul.f32 %v701, %v685
  %v718 = vmul.f32 %v702, %v686
  %v719 = vmul.f32 %v703, %v687
  %v720 = vmul.f32 %v704, %v688
  %v721 = vmul.f32 %v705, %v689
  %v722 = vmul.f32 %v706, %v690
  %v723 = vmul.f32 %v707, %v691
  %v724 = vmul.f32 %v708, %v692
  %v725 = vmul.f32 %v709, %v693
  %v726 = vmul.f32 %v710, %v694
  %727 = vmatpush.msra.mxu0 %v726
  %728 = vmatpush.msra.mxu0 %v725
  %729 = vmatpush.msra.mxu0 %v724
  %730 = vmatpush.msra.mxu0 %v723
  %731 = vmatpush.msra.mxu0 %v722
  %732 = vmatpush.msra.mxu0 %v721
  %733 = vmatpush.msra.mxu0 %v720
  %734 = vmatpush.msra.mxu0 %v719
  %735 = vmatpush.msra.mxu0 %v718
  %736 = vmatpush.msra.mxu0 %v717
  %737 = vmatpush.msra.mxu0 %v716
  %738 = vmatpush.msra.mxu0 %v715
  %739 = vmatpush.msra.mxu0 %v714
  %740 = vmatpush.msra.mxu0 %v713
  %741 = vmatpush.msra.mxu0 %v712
  %742 = vmatpush.msra.mxu0 %v711
  %743 = vmatmul.f32.gmra.mxu0 %v75
  %v744 = vpop.f32.mrf.mxu0
  %v745 = vadd.f32 0.0, %v744
  %746 = vmatmul.f32.gmra.mxu0 %v76
  %v747 = vpop.f32.mrf.mxu0
  %v748 = vadd.f32 0.0, %v747
  %749 = vdwg.mxu0
  %v750 = vmax.f32 %v745, 0.0
  %v751 = vmax.f32 %v748, 0.0
  %v753 = vperm.slane %v93, 0
  %755 = vmatpush.msra.mxu0 %v92
  %756 = vmatpush.msra.mxu0 %v91
  %757 = vmatpush.msra.mxu0 %v90
  %758 = vmatpush.msra.mxu0 %v89
  %759 = vmatpush.msra.mxu0 %v88
  %760 = vmatpush.msra.mxu0 %v87
  %761 = vmatpush.msra.mxu0 %v86
  %762 = vmatpush.msra.mxu0 %v85
  %763 = vmatpush.msra.mxu0 %v84
  %764 = vmatpush.msra.mxu0 %v83
  %765 = vmatpush.msra.mxu0 %v82
  %766 = vmatpush.msra.mxu0 %v81
  %767 = vmatpush.msra.mxu0 %v80
  %768 = vmatpush.msra.mxu0 %v79
  %769 = vmatpush.msra.mxu0 %v78
  %770 = vmatpush.msra.mxu0 %v77
  %771 = vmatmul.f32.gmra.mxu0 %v750
  %v772 = vpop.f32.mrf.mxu0
  %v773 = vadd.f32 %v753, %v772
  %774 = vmatmul.f32.gmra.mxu0 %v751
  %v775 = vpop.f32.mrf.mxu0
  %v776 = vadd.f32 %v753, %v775
  %777 = vdwg.mxu0
  %778 = vst [vmem:[%s7] sm:$0xff] %v773
  %779 = vst [vmem:[%s7 + $0x8] sm:$0xff] %v776
  %v780 = vld [vmem:[%s0 + $0x80] sm:$0xff]
  %v781 = vld [vmem:[%s0 + $0x88] sm:$0xff]
  %v782 = vld [vmem:[%s0 + $0x90] sm:$0xff]
  %v783 = vld [vmem:[%s0 + $0x98] sm:$0xff]
  %v784 = vld [vmem:[%s0 + $0xa0] sm:$0xff]
  %v785 = vld [vmem:[%s0 + $0xa8] sm:$0xff]
  %v786 = vld [vmem:[%s0 + $0xb0] sm:$0xff]
  %v787 = vld [vmem:[%s0 + $0xb8] sm:$0xff]
  %v788 = vld [vmem:[%s0 + $0xc0] sm:$0xff]
  %v789 = vld [vmem:[%s0 + $0xc8] sm:$0xff]
  %v790 = vld [vmem:[%s0 + $0xd0] sm:$0xff]
  %v791 = vld [vmem:[%s0 + $0xd8] sm:$0xff]
  %v792 = vld [vmem:[%s0 + $0xe0] sm:$0xff]
  %v793 = vld [vmem:[%s0 + $0xe8] sm:$0xff]
  %v794 = vld [vmem:[%s0 + $0xf0] sm:$0xff]
  %v795 = vld [vmem:[%s0 + $0xf8] sm:$0xff]
  %796 = vmatpush.msra.mxu0 %v72
  %797 = vmatpush.msra.mxu0 %v70
  %798 = vmatpush.msra.mxu0 %v68
  %799 = vmatpush.msra.mxu0 %v66
  %800 = vmatpush.msra.mxu0 %v64
  %801 = vmatpush.msra.mxu0 %v62
  %802 = vmatpush.msra.mxu0 %v60
  %803 = vmatpush.msra.mxu0 %v58
  %804 = vmatpush.msra.mxu0 %v56
  %805 = vmatpush.msra.mxu0 %v54
  %806 = vmatpush.msra.mxu0 %v52
  %807 = vmatpush.msra.mxu0 %v50
  %808 = vmatpush.msra.mxu0 %v48
  %809 = vmatpush.msra.mxu0 %v46
  %810 = vmatpush.msra.mxu0 %v44
  %811 = vmatpush.msra.mxu0 %v42
  %812 = vmatmul.f32.gmra.mxu0 %v780
  %v813 = vpop.f32.mrf.mxu0
  %v814 = vadd.f32 0.0, %v813
  %815 = vmatmul.f32.gmra.mxu0 %v781
  %v816 = vpop.f32.mrf.mxu0
  %v817 = vadd.f32 0.0, %v816
  %818 = vmatmul.f32.gmra.mxu0 %v782
  %v819 = vpop.f32.mrf.mxu0
  %v820 = vadd.f32 0.0, %v819
  %821 = vmatmul.f32.gmra.mxu0 %v783
  %v822 = vpop.f32.mrf.mxu0
  %v823 = vadd.f32 0.0, %v822
  %824 = vmatmul.f32.gmra.mxu0 %v784
  %v825 = vpop.f32.mrf.mxu0
  %v826 = vadd.f32 0.0, %v825
  %827 = vmatmul.f32.gmra.mxu0 %v785
  %v828 = vpop.f32.mrf.mxu0
  %v829 = vadd.f32 0.0, %v828
  %830 = vmatmul.f32.gmra.mxu0 %v786
  %v831 = vpop.f32.mrf.mxu0
  %v832 = vadd.f32 0.0, %v831
  %833 = vmatmul.f32.gmra.mxu0 %v787
  %v834 = vpop.f32.mrf.mxu0
  %v835 = vadd.f32 0.0, %v834
  %836 = vmatmul.f32.gmra.mxu0 %v788
  %v837 = vpop.f32.mrf.mxu0
  %v838 = vadd.f32 0.0, %v837
  %839 = vmatmul.f32.gmra.mxu0 %v789
  %v840 = vpop.f32.mrf.mxu0
  %v841 = vadd.f32 0.0, %v840
  %842 = vmatmul.f32.gmra.mxu0 %v790
  %v843 = vpop.f32.mrf.mxu0
  %v844 = vadd.f32 0.0, %v843
  %845 = vmatmul.f32.gmra.mxu0 %v791
  %v846 = vpop.f32.mrf.mxu0
  %v847 = vadd.f32 0.0, %v846
  %848 = vmatmul.f32.gmra.mxu0 %v792
  %v849 = vpop.f32.mrf.mxu0
  %v850 = vadd.f32 0.0, %v849
  %851 = vmatmul.f32.gmra.mxu0 %v793
  %v852 = vpop.f32.mrf.mxu0
  %v853 = vadd.f32 0.0, %v852
  %854 = vmatmul.f32.gmra.mxu0 %v794
  %v855 = vpop.f32.mrf.mxu0
  %v856 = vadd.f32 0.0, %v855
  %857 = vmatmul.f32.gmra.mxu0 %v795
  %v858 = vpop.f32.mrf.mxu0
  %v859 = vadd.f32 0.0, %v858
  %860 = vdwg.mxu0
  %861 = vmatpush.msra.mxu0 %v73
  %862 = vmatpush.msra.mxu0 %v71
  %863 = vmatpush.msra.mxu0 %v69
  %864 = vmatpush.msra.mxu0 %v67
  %865 = vmatpush.msra.mxu0 %v65
  %866 = vmatpush.msra.mxu0 %v63
  %867 = vmatpush.msra.mxu0 %v61
  %868 = vmatpush.msra.mxu0 %v59
  %869 = vmatpush.msra.mxu0 %v57
  %870 = vmatpush.msra.mxu0 %v55
  %871 = vmatpush.msra.mxu0 %v53
  %872 = vmatpush.msra.mxu0 %v51
  %873 = vmatpush.msra.mxu0 %v49
  %874 = vmatpush.msra.mxu0 %v47
  %875 = vmatpush.msra.mxu0 %v45
  %876 = vmatpush.msra.mxu0 %v43
  %877 = vmatmul.f32.gmra.mxu0 %v780
  %v878 = vpop.f32.mrf.mxu0
  %v879 = vadd.f32 0.0, %v878
  %880 = vmatmul.f32.gmra.mxu0 %v781
  %v881 = vpop.f32.mrf.mxu0
  %v882 = vadd.f32 0.0, %v881
  %883 = vmatmul.f32.gmra.mxu0 %v782
  %v884 = vpop.f32.mrf.mxu0
  %v885 = vadd.f32 0.0, %v884
  %886 = vmatmul.f32.gmra.mxu0 %v783
  %v887 = vpop.f32.mrf.mxu0
  %v888 = vadd.f32 0.0, %v887
  %889 = vmatmul.f32.gmra.mxu0 %v784
  %v890 = vpop.f32.mrf.mxu0
  %v891 = vadd.f32 0.0, %v890
  %892 = vmatmul.f32.gmra.mxu0 %v785
  %v893 = vpop.f32.mrf.mxu0
  %v894 = vadd.f32 0.0, %v893
  %895 = vmatmul.f32.gmra.mxu0 %v786
  %v896 = vpop.f32.mrf.mxu0
  %v897 = vadd.f32 0.0, %v896
  %898 = vmatmul.f32.gmra.mxu0 %v787
  %v899 = vpop.f32.mrf.mxu0
  %v900 = vadd.f32 0.0, %v899
  %901 = vmatmul.f32.gmra.mxu0 %v788
  %v902 = vpop.f32.mrf.mxu0
  %v903 = vadd.f32 0.0, %v902
  %904 = vmatmul.f32.gmra.mxu0 %v789
  %v905 = vpop.f32.mrf.mxu0
  %v906 = vadd.f32 0.0, %v905
  %907 = vmatmul.f32.gmra.mxu0 %v790
  %v908 = vpop.f32.mrf.mxu0
  %v909 = vadd.f32 0.0, %v908
  %910 = vmatmul.f32.gmra.mxu0 %v791
  %v911 = vpop.f32.mrf.mxu0
  %v912 = vadd.f32 0.0, %v911
  %913 = vmatmul.f32.gmra.mxu0 %v792
  %v914 = vpop.f32.mrf.mxu0
  %v915 = vadd.f32 0.0, %v914
  %916 = vmatmul.f32.gmra.mxu0 %v793
  %v917 = vpop.f32.mrf.mxu0
  %v918 = vadd.f32 0.0, %v917
  %919 = vmatmul.f32.gmra.mxu0 %v794
  %v920 = vpop.f32.mrf.mxu0
  %v921 = vadd.f32 0.0, %v920
  %922 = vmatmul.f32.gmra.mxu0 %v795
  %v923 = vpop.f32.mrf.mxu0
  %v924 = vadd.f32 0.0, %v923
  %925 = vdwg.mxu0
  %926 = vmatpush.msra.mxu0 %v859
  %927 = vmatpush.msra.mxu0 %v856
  %928 = vmatpush.msra.mxu0 %v853
  %929 = vmatpush.msra.mxu0 %v850
  %930 = vmatpush.msra.mxu0 %v847
  %931 = vmatpush.msra.mxu0 %v844
  %932 = vmatpush.msra.mxu0 %v841
  %933 = vmatpush.msra.mxu0 %v838
  %934 = vmatpush.msra.mxu0 %v835
  %935 = vmatpush.msra.mxu0 %v832
  %936 = vmatpush.msra.mxu0 %v829
  %937 = vmatpush.msra.mxu0 %v826
  %938 = vmatpush.msra.mxu0 %v823
  %939 = vmatpush.msra.mxu0 %v820
  %940 = vmatpush.msra.mxu0 %v817
  %941 = vmatpush.msra.mxu0 %v814
  %942 = vmatmul.f32.gmra.mxu0 %v26
  %v943 = vpop.f32.mrf.mxu0
  %v944 = vadd.f32 %v241, %v943
  %945 = vmatmul.f32.gmra.mxu0 %v27
  %v946 = vpop.f32.mrf.mxu0
  %v947 = vadd.f32 %v241, %v946
  %948 = vmatmul.f32.gmra.mxu0 %v28
  %v949 = vpop.f32.mrf.mxu0
  %v950 = vadd.f32 %v241, %v949
  %951 = vmatmul.f32.gmra.mxu0 %v29
  %v952 = vpop.f32.mrf.mxu0
  %v953 = vadd.f32 %v241, %v952
  %954 = vmatmul.f32.gmra.mxu0 %v30
  %v955 = vpop.f32.mrf.mxu0
  %v956 = vadd.f32 %v241, %v955
  %957 = vmatmul.f32.gmra.mxu0 %v31
  %v958 = vpop.f32.mrf.mxu0
  %v959 = vadd.f32 %v241, %v958
  %960 = vmatmul.f32.gmra.mxu0 %v32
  %v961 = vpop.f32.mrf.mxu0
  %v962 = vadd.f32 %v241, %v961
  %963 = vmatmul.f32.gmra.mxu0 %v33
  %v964 = vpop.f32.mrf.mxu0
  %v965 = vadd.f32 %v241, %v964
  %966 = vmatmul.f32.gmra.mxu0 %v34
  %v967 = vpop.f32.mrf.mxu0
  %v968 = vadd.f32 %v241, %v967
  %969 = vmatmul.f32.gmra.mxu0 %v35
  %v970 = vpop.f32.mrf.mxu0
  %v971 = vadd.f32 %v241, %v970
  %972 = vmatmul.f32.gmra.mxu0 %v36
  %v973 = vpop.f32.mrf.mxu0
  %v974 = vadd.f32 %v241, %v973
  %975 = vmatmul.f32.gmra.mxu0 %v37
  %v976 = vpop.f32.mrf.mxu0
  %v977 = vadd.f32 %v241, %v976
  %978 = vmatmul.f32.gmra.mxu0 %v38
  %v979 = vpop.f32.mrf.mxu0
  %v980 = vadd.f32 %v241, %v979
  %981 = vmatmul.f32.gmra.mxu0 %v39
  %v982 = vpop.f32.mrf.mxu0
  %v983 = vadd.f32 %v241, %v982
  %984 = vmatmul.f32.gmra.mxu0 %v40
  %v985 = vpop.f32.mrf.mxu0
  %v986 = vadd.f32 %v241, %v985
  %987 = vmatmul.f32.gmra.mxu0 %v41
  %v988 = vpop.f32.mrf.mxu0
  %v989 = vadd.f32 %v241, %v988
  %990 = vdwg.mxu0
  %991 = vmatpush.msra.mxu0 %v924
  %992 = vmatpush.msra.mxu0 %v921
  %993 = vmatpush.msra.mxu0 %v918
  %994 = vmatpush.msra.mxu0 %v915
  %995 = vmatpush.msra.mxu0 %v912
  %996 = vmatpush.msra.mxu0 %v909
  %997 = vmatpush.msra.mxu0 %v906
  %998 = vmatpush.msra.mxu0 %v903
  %999 = vmatpush.msra.mxu0 %v900
  %1000 = vmatpush.msra.mxu0 %v897
  %1001 = vmatpush.msra.mxu0 %v894
  %1002 = vmatpush.msra.mxu0 %v891
  %1003 = vmatpush.msra.mxu0 %v888
  %1004 = vmatpush.msra.mxu0 %v885
  %1005 = vmatpush.msra.mxu0 %v882
  %1006 = vmatpush.msra.mxu0 %v879
  %1007 = vmatmul.f32.gmra.mxu0 %v26
  %v1008 = vpop.f32.mrf.mxu0
  %v1009 = vadd.f32 %v242, %v1008
  %1010 = vmatmul.f32.gmra.mxu0 %v27
  %v1011 = vpop.f32.mrf.mxu0
  %v1012 = vadd.f32 %v242, %v1011
  %1013 = vmatmul.f32.gmra.mxu0 %v28
  %v1014 = vpop.f32.mrf.mxu0
  %v1015 = vadd.f32 %v242, %v1014
  %1016 = vmatmul.f32.gmra.mxu0 %v29
  %v1017 = vpop.f32.mrf.mxu0
  %v1018 = vadd.f32 %v242, %v1017
  %1019 = vmatmul.f32.gmra.mxu0 %v30
  %v1020 = vpop.f32.mrf.mxu0
  %v1021 = vadd.f32 %v242, %v1020
  %1022 = vmatmul.f32.gmra.mxu0 %v31
  %v1023 = vpop.f32.mrf.mxu0
  %v1024 = vadd.f32 %v242, %v1023
  %1025 = vmatmul.f32.gmra.mxu0 %v32
  %v1026 = vpop.f32.mrf.mxu0
  %v1027 = vadd.f32 %v242, %v1026
  %1028 = vmatmul.f32.gmra.mxu0 %v33
  %v1029 = vpop.f32.mrf.mxu0
  %v1030 = vadd.f32 %v242, %v1029
  %1031 = vmatmul.f32.gmra.mxu0 %v34
  %v1032 = vpop.f32.mrf.mxu0
  %v1033 = vadd.f32 %v242, %v1032
  %1034 = vmatmul.f32.gmra.mxu0 %v35
  %v1035 = vpop.f32.mrf.mxu0
  %v1036 = vadd.f32 %v242, %v1035
  %1037 = vmatmul.f32.gmra.mxu0 %v36
  %v1038 = vpop.f32.mrf.mxu0
  %v1039 = vadd.f32 %v242, %v1038
  %1040 = vmatmul.f32.gmra.mxu0 %v37
  %v1041 = vpop.f32.mrf.mxu0
  %v1042 = vadd.f32 %v242, %v1041
  %1043 = vmatmul.f32.gmra.mxu0 %v38
  %v1044 = vpop.f32.mrf.mxu0
  %v1045 = vadd.f32 %v242, %v1044
  %1046 = vmatmul.f32.gmra.mxu0 %v39
  %v1047 = vpop.f32.mrf.mxu0
  %v1048 = vadd.f32 %v242, %v1047
  %1049 = vmatmul.f32.gmra.mxu0 %v40
  %v1050 = vpop.f32.mrf.mxu0
  %v1051 = vadd.f32 %v242, %v1050
  %1052 = vmatmul.f32.gmra.mxu0 %v41
  %v1053 = vpop.f32.mrf.mxu0
  %v1054 = vadd.f32 %v242, %v1053
  %1055 = vdwg.mxu0
  %v1056 = vxor.u32 %v944, 2147483648
  %v1057 = vxor.u32 %v947, 2147483648
  %v1058 = vxor.u32 %v950, 2147483648
  %v1059 = vxor.u32 %v953, 2147483648
  %v1060 = vxor.u32 %v956, 2147483648
  %v1061 = vxor.u32 %v959, 2147483648
  %v1062 = vxor.u32 %v962, 2147483648
  %v1063 = vxor.u32 %v965, 2147483648
  %v1064 = vxor.u32 %v968, 2147483648
  %v1065 = vxor.u32 %v971, 2147483648
  %v1066 = vxor.u32 %v974, 2147483648
  %v1067 = vxor.u32 %v977, 2147483648
  %v1068 = vxor.u32 %v980, 2147483648
  %v1069 = vxor.u32 %v983, 2147483648
  %v1070 = vxor.u32 %v986, 2147483648
  %v1071 = vxor.u32 %v989, 2147483648
  %v1072 = vmul.f32 %v1056, 1.442695
  %v1073 = vpow.pop %v1072
  %v1074 = vmul.f32 %v1057, 1.442695
  %v1075 = vpow.pop %v1074
  %v1076 = vmul.f32 %v1058, 1.442695
  %v1077 = vpow.pop %v1076
  %v1078 = vmul.f32 %v1059, 1.442695
  %v1079 = vpow.pop %v1078
  %v1080 = vmul.f32 %v1060, 1.442695
  %v1081 = vpow.pop %v1080
  %v1082 = vmul.f32 %v1061, 1.442695
  %v1083 = vpow.pop %v1082
  %v1084 = vmul.f32 %v1062, 1.442695
  %v1085 = vpow.pop %v1084
  %v1086 = vmul.f32 %v1063, 1.442695
  %v1087 = vpow.pop %v1086
  %v1088 = vmul.f32 %v1064, 1.442695
  %v1089 = vpow.pop %v1088
  %v1090 = vmul.f32 %v1065, 1.442695
  %v1091 = vpow.pop %v1090
  %v1092 = vmul.f32 %v1066, 1.442695
  %v1093 = vpow.pop %v1092
  %v1094 = vmul.f32 %v1067, 1.442695
  %v1095 = vpow.pop %v1094
  %v1096 = vmul.f32 %v1068, 1.442695
  %v1097 = vpow.pop %v1096
  %v1098 = vmul.f32 %v1069, 1.442695
  %v1099 = vpow.pop %v1098
  %v1100 = vmul.f32 %v1070, 1.442695
  %v1101 = vpow.pop %v1100
  %v1102 = vmul.f32 %v1071, 1.442695
  %v1103 = vpow.pop %v1102
  %v1104 = vadd.f32 %v1073, 1.0
  %v1105 = vadd.f32 %v1075, 1.0
  %v1106 = vadd.f32 %v1077, 1.0
  %v1107 = vadd.f32 %v1079, 1.0
  %v1108 = vadd.f32 %v1081, 1.0
  %v1109 = vadd.f32 %v1083, 1.0
  %v1110 = vadd.f32 %v1085, 1.0
  %v1111 = vadd.f32 %v1087, 1.0
  %v1112 = vadd.f32 %v1089, 1.0
  %v1113 = vadd.f32 %v1091, 1.0
  %v1114 = vadd.f32 %v1093, 1.0
  %v1115 = vadd.f32 %v1095, 1.0
  %v1116 = vadd.f32 %v1097, 1.0
  %v1117 = vadd.f32 %v1099, 1.0
  %v1118 = vadd.f32 %v1101, 1.0
  %v1119 = vadd.f32 %v1103, 1.0
  %v1120 = vrcp.pop %v1104
  %v1121 = vmul.f32 %v1104, %v1120
  %v1122 = vsub.f32 1.0, %v1121
  %v1123 = vmul.f32 %v1120, %v1122
  %v1124 = vadd.f32 %v1120, %v1123
  %vm1125 = vweird.f32 %v1104
  %vm1126 = vweird.f32 %v1120
  %vm1127 = vmor %vm1125, %vm1126
  %v1128 = vsel %vm1127, %v1120, %v1124
  %v1129 = vand.u32 2147483647, %v1104
  %vm1130 = vcmp.eq.f32.partialorder %v1129, 8.507059e+37
  %v1131 = vand.u32 %v1104, 2147483648
  %v1132 = vor.u32 1.1754944e-38, %v1131
  %v1133 = vsel %vm1130, %v1132, %v1128
  %v1134 = vmul.f32 1.0, %v1133
  %v1135 = vrcp.pop %v1105
  %v1136 = vmul.f32 %v1105, %v1135
  %v1137 = vsub.f32 1.0, %v1136
  %v1138 = vmul.f32 %v1135, %v1137
  %v1139 = vadd.f32 %v1135, %v1138
  %vm1140 = vweird.f32 %v1105
  %vm1141 = vweird.f32 %v1135
  %vm1142 = vmor %vm1140, %vm1141
  %v1143 = vsel %vm1142, %v1135, %v1139
  %v1144 = vand.u32 2147483647, %v1105
  %vm1145 = vcmp.eq.f32.partialorder %v1144, 8.507059e+37
  %v1146 = vand.u32 %v1105, 2147483648
  %v1147 = vor.u32 1.1754944e-38, %v1146
  %v1148 = vsel %vm1145, %v1147, %v1143
  %v1149 = vmul.f32 1.0, %v1148
  %v1150 = vrcp.pop %v1106
  %v1151 = vmul.f32 %v1106, %v1150
  %v1152 = vsub.f32 1.0, %v1151
  %v1153 = vmul.f32 %v1150, %v1152
  %v1154 = vadd.f32 %v1150, %v1153
  %vm1155 = vweird.f32 %v1106
  %vm1156 = vweird.f32 %v1150
  %vm1157 = vmor %vm1155, %vm1156
  %v1158 = vsel %vm1157, %v1150, %v1154
  %v1159 = vand.u32 2147483647, %v1106
  %vm1160 = vcmp.eq.f32.partialorder %v1159, 8.507059e+37
  %v1161 = vand.u32 %v1106, 2147483648
  %v1162 = vor.u32 1.1754944e-38, %v1161
  %v1163 = vsel %vm1160, %v1162, %v1158
  %v1164 = vmul.f32 1.0, %v1163
  %v1165 = vrcp.pop %v1107
  %v1166 = vmul.f32 %v1107, %v1165
  %v1167 = vsub.f32 1.0, %v1166
  %v1168 = vmul.f32 %v1165, %v1167
  %v1169 = vadd.f32 %v1165, %v1168
  %vm1170 = vweird.f32 %v1107
  %vm1171 = vweird.f32 %v1165
  %vm1172 = vmor %vm1170, %vm1171
  %v1173 = vsel %vm1172, %v1165, %v1169
  %v1174 = vand.u32 2147483647, %v1107
  %vm1175 = vcmp.eq.f32.partialorder %v1174, 8.507059e+37
  %v1176 = vand.u32 %v1107, 2147483648
  %v1177 = vor.u32 1.1754944e-38, %v1176
  %v1178 = vsel %vm1175, %v1177, %v1173
  %v1179 = vmul.f32 1.0, %v1178
  %v1180 = vrcp.pop %v1108
  %v1181 = vmul.f32 %v1108, %v1180
  %v1182 = vsub.f32 1.0, %v1181
  %v1183 = vmul.f32 %v1180, %v1182
  %v1184 = vadd.f32 %v1180, %v1183
  %vm1185 = vweird.f32 %v1108
  %vm1186 = vweird.f32 %v1180
  %vm1187 = vmor %vm1185, %vm1186
  %v1188 = vsel %vm1187, %v1180, %v1184
  %v1189 = vand.u32 2147483647, %v1108
  %vm1190 = vcmp.eq.f32.partialorder %v1189, 8.507059e+37
  %v1191 = vand.u32 %v1108, 2147483648
  %v1192 = vor.u32 1.1754944e-38, %v1191
  %v1193 = vsel %vm1190, %v1192, %v1188
  %v1194 = vmul.f32 1.0, %v1193
  %v1195 = vrcp.pop %v1109
  %v1196 = vmul.f32 %v1109, %v1195
  %v1197 = vsub.f32 1.0, %v1196
  %v1198 = vmul.f32 %v1195, %v1197
  %v1199 = vadd.f32 %v1195, %v1198
  %vm1200 = vweird.f32 %v1109
  %vm1201 = vweird.f32 %v1195
  %vm1202 = vmor %vm1200, %vm1201
  %v1203 = vsel %vm1202, %v1195, %v1199
  %v1204 = vand.u32 2147483647, %v1109
  %vm1205 = vcmp.eq.f32.partialorder %v1204, 8.507059e+37
  %v1206 = vand.u32 %v1109, 2147483648
  %v1207 = vor.u32 1.1754944e-38, %v1206
  %v1208 = vsel %vm1205, %v1207, %v1203
  %v1209 = vmul.f32 1.0, %v1208
  %v1210 = vrcp.pop %v1110
  %v1211 = vmul.f32 %v1110, %v1210
  %v1212 = vsub.f32 1.0, %v1211
  %v1213 = vmul.f32 %v1210, %v1212
  %v1214 = vadd.f32 %v1210, %v1213
  %vm1215 = vweird.f32 %v1110
  %vm1216 = vweird.f32 %v1210
  %vm1217 = vmor %vm1215, %vm1216
  %v1218 = vsel %vm1217, %v1210, %v1214
  %v1219 = vand.u32 2147483647, %v1110
  %vm1220 = vcmp.eq.f32.partialorder %v1219, 8.507059e+37
  %v1221 = vand.u32 %v1110, 2147483648
  %v1222 = vor.u32 1.1754944e-38, %v1221
  %v1223 = vsel %vm1220, %v1222, %v1218
  %v1224 = vmul.f32 1.0, %v1223
  %v1225 = vrcp.pop %v1111
  %v1226 = vmul.f32 %v1111, %v1225
  %v1227 = vsub.f32 1.0, %v1226
  %v1228 = vmul.f32 %v1225, %v1227
  %v1229 = vadd.f32 %v1225, %v1228
  %vm1230 = vweird.f32 %v1111
  %vm1231 = vweird.f32 %v1225
  %vm1232 = vmor %vm1230, %vm1231
  %v1233 = vsel %vm1232, %v1225, %v1229
  %v1234 = vand.u32 2147483647, %v1111
  %vm1235 = vcmp.eq.f32.partialorder %v1234, 8.507059e+37
  %v1236 = vand.u32 %v1111, 2147483648
  %v1237 = vor.u32 1.1754944e-38, %v1236
  %v1238 = vsel %vm1235, %v1237, %v1233
  %v1239 = vmul.f32 1.0, %v1238
  %v1240 = vrcp.pop %v1112
  %v1241 = vmul.f32 %v1112, %v1240
  %v1242 = vsub.f32 1.0, %v1241
  %v1243 = vmul.f32 %v1240, %v1242
  %v1244 = vadd.f32 %v1240, %v1243
  %vm1245 = vweird.f32 %v1112
  %vm1246 = vweird.f32 %v1240
  %vm1247 = vmor %vm1245, %vm1246
  %v1248 = vsel %vm1247, %v1240, %v1244
  %v1249 = vand.u32 2147483647, %v1112
  %vm1250 = vcmp.eq.f32.partialorder %v1249, 8.507059e+37
  %v1251 = vand.u32 %v1112, 2147483648
  %v1252 = vor.u32 1.1754944e-38, %v1251
  %v1253 = vsel %vm1250, %v1252, %v1248
  %v1254 = vmul.f32 1.0, %v1253
  %v1255 = vrcp.pop %v1113
  %v1256 = vmul.f32 %v1113, %v1255
  %v1257 = vsub.f32 1.0, %v1256
  %v1258 = vmul.f32 %v1255, %v1257
  %v1259 = vadd.f32 %v1255, %v1258
  %vm1260 = vweird.f32 %v1113
  %vm1261 = vweird.f32 %v1255
  %vm1262 = vmor %vm1260, %vm1261
  %v1263 = vsel %vm1262, %v1255, %v1259
  %v1264 = vand.u32 2147483647, %v1113
  %vm1265 = vcmp.eq.f32.partialorder %v1264, 8.507059e+37
  %v1266 = vand.u32 %v1113, 2147483648
  %v1267 = vor.u32 1.1754944e-38, %v1266
  %v1268 = vsel %vm1265, %v1267, %v1263
  %v1269 = vmul.f32 1.0, %v1268
  %v1270 = vrcp.pop %v1114
  %v1271 = vmul.f32 %v1114, %v1270
  %v1272 = vsub.f32 1.0, %v1271
  %v1273 = vmul.f32 %v1270, %v1272
  %v1274 = vadd.f32 %v1270, %v1273
  %vm1275 = vweird.f32 %v1114
  %vm1276 = vweird.f32 %v1270
  %vm1277 = vmor %vm1275, %vm1276
  %v1278 = vsel %vm1277, %v1270, %v1274
  %v1279 = vand.u32 2147483647, %v1114
  %vm1280 = vcmp.eq.f32.partialorder %v1279, 8.507059e+37
  %v1281 = vand.u32 %v1114, 2147483648
  %v1282 = vor.u32 1.1754944e-38, %v1281
  %v1283 = vsel %vm1280, %v1282, %v1278
  %v1284 = vmul.f32 1.0, %v1283
  %v1285 = vrcp.pop %v1115
  %v1286 = vmul.f32 %v1115, %v1285
  %v1287 = vsub.f32 1.0, %v1286
  %v1288 = vmul.f32 %v1285, %v1287
  %v1289 = vadd.f32 %v1285, %v1288
  %vm1290 = vweird.f32 %v1115
  %vm1291 = vweird.f32 %v1285
  %vm1292 = vmor %vm1290, %vm1291
  %v1293 = vsel %vm1292, %v1285, %v1289
  %v1294 = vand.u32 2147483647, %v1115
  %vm1295 = vcmp.eq.f32.partialorder %v1294, 8.507059e+37
  %v1296 = vand.u32 %v1115, 2147483648
  %v1297 = vor.u32 1.1754944e-38, %v1296
  %v1298 = vsel %vm1295, %v1297, %v1293
  %v1299 = vmul.f32 1.0, %v1298
  %v1300 = vrcp.pop %v1116
  %v1301 = vmul.f32 %v1116, %v1300
  %v1302 = vsub.f32 1.0, %v1301
  %v1303 = vmul.f32 %v1300, %v1302
  %v1304 = vadd.f32 %v1300, %v1303
  %vm1305 = vweird.f32 %v1116
  %vm1306 = vweird.f32 %v1300
  %vm1307 = vmor %vm1305, %vm1306
  %v1308 = vsel %vm1307, %v1300, %v1304
  %v1309 = vand.u32 2147483647, %v1116
  %vm1310 = vcmp.eq.f32.partialorder %v1309, 8.507059e+37
  %v1311 = vand.u32 %v1116, 2147483648
  %v1312 = vor.u32 1.1754944e-38, %v1311
  %v1313 = vsel %vm1310, %v1312, %v1308
  %v1314 = vmul.f32 1.0, %v1313
  %v1315 = vrcp.pop %v1117
  %v1316 = vmul.f32 %v1117, %v1315
  %v1317 = vsub.f32 1.0, %v1316
  %v1318 = vmul.f32 %v1315, %v1317
  %v1319 = vadd.f32 %v1315, %v1318
  %vm1320 = vweird.f32 %v1117
  %vm1321 = vweird.f32 %v1315
  %vm1322 = vmor %vm1320, %vm1321
  %v1323 = vsel %vm1322, %v1315, %v1319
  %v1324 = vand.u32 2147483647, %v1117
  %vm1325 = vcmp.eq.f32.partialorder %v1324, 8.507059e+37
  %v1326 = vand.u32 %v1117, 2147483648
  %v1327 = vor.u32 1.1754944e-38, %v1326
  %v1328 = vsel %vm1325, %v1327, %v1323
  %v1329 = vmul.f32 1.0, %v1328
  %v1330 = vrcp.pop %v1118
  %v1331 = vmul.f32 %v1118, %v1330
  %v1332 = vsub.f32 1.0, %v1331
  %v1333 = vmul.f32 %v1330, %v1332
  %v1334 = vadd.f32 %v1330, %v1333
  %vm1335 = vweird.f32 %v1118
  %vm1336 = vweird.f32 %v1330
  %vm1337 = vmor %vm1335, %vm1336
  %v1338 = vsel %vm1337, %v1330, %v1334
  %v1339 = vand.u32 2147483647, %v1118
  %vm1340 = vcmp.eq.f32.partialorder %v1339, 8.507059e+37
  %v1341 = vand.u32 %v1118, 2147483648
  %v1342 = vor.u32 1.1754944e-38, %v1341
  %v1343 = vsel %vm1340, %v1342, %v1338
  %v1344 = vmul.f32 1.0, %v1343
  %v1345 = vrcp.pop %v1119
  %v1346 = vmul.f32 %v1119, %v1345
  %v1347 = vsub.f32 1.0, %v1346
  %v1348 = vmul.f32 %v1345, %v1347
  %v1349 = vadd.f32 %v1345, %v1348
  %vm1350 = vweird.f32 %v1119
  %vm1351 = vweird.f32 %v1345
  %vm1352 = vmor %vm1350, %vm1351
  %v1353 = vsel %vm1352, %v1345, %v1349
  %v1354 = vand.u32 2147483647, %v1119
  %vm1355 = vcmp.eq.f32.partialorder %v1354, 8.507059e+37
  %v1356 = vand.u32 %v1119, 2147483648
  %v1357 = vor.u32 1.1754944e-38, %v1356
  %v1358 = vsel %vm1355, %v1357, %v1353
  %v1359 = vmul.f32 1.0, %v1358
  %v1360 = vtanh.pop %v1009
  %v1361 = vtanh.pop %v1012
  %v1362 = vtanh.pop %v1015
  %v1363 = vtanh.pop %v1018
  %v1364 = vtanh.pop %v1021
  %v1365 = vtanh.pop %v1024
  %v1366 = vtanh.pop %v1027
  %v1367 = vtanh.pop %v1030
  %v1368 = vtanh.pop %v1033
  %v1369 = vtanh.pop %v1036
  %v1370 = vtanh.pop %v1039
  %v1371 = vtanh.pop %v1042
  %v1372 = vtanh.pop %v1045
  %v1373 = vtanh.pop %v1048
  %v1374 = vtanh.pop %v1051
  %v1375 = vtanh.pop %v1054
  %v1376 = vsub.f32 1.0, %v1134
  %v1377 = vsub.f32 1.0, %v1149
  %v1378 = vsub.f32 1.0, %v1164
  %v1379 = vsub.f32 1.0, %v1179
  %v1380 = vsub.f32 1.0, %v1194
  %v1381 = vsub.f32 1.0, %v1209
  %v1382 = vsub.f32 1.0, %v1224
  %v1383 = vsub.f32 1.0, %v1239
  %v1384 = vsub.f32 1.0, %v1254
  %v1385 = vsub.f32 1.0, %v1269
  %v1386 = vsub.f32 1.0, %v1284
  %v1387 = vsub.f32 1.0, %v1299
  %v1388 = vsub.f32 1.0, %v1314
  %v1389 = vsub.f32 1.0, %v1329
  %v1390 = vsub.f32 1.0, %v1344
  %v1391 = vsub.f32 1.0, %v1359
  %v1392 = vmul.f32 %v1376, %v1360
  %v1393 = vmul.f32 %v1377, %v1361
  %v1394 = vmul.f32 %v1378, %v1362
  %v1395 = vmul.f32 %v1379, %v1363
  %v1396 = vmul.f32 %v1380, %v1364
  %v1397 = vmul.f32 %v1381, %v1365
  %v1398 = vmul.f32 %v1382, %v1366
  %v1399 = vmul.f32 %v1383, %v1367
  %v1400 = vmul.f32 %v1384, %v1368
  %v1401 = vmul.f32 %v1385, %v1369
  %v1402 = vmul.f32 %v1386, %v1370
  %v1403 = vmul.f32 %v1387, %v1371
  %v1404 = vmul.f32 %v1388, %v1372
  %v1405 = vmul.f32 %v1389, %v1373
  %v1406 = vmul.f32 %v1390, %v1374
  %v1407 = vmul.f32 %v1391, %v1375
  %1408 = vmatpush.msra.mxu0 %v1407
  %1409 = vmatpush.msra.mxu0 %v1406
  %1410 = vmatpush.msra.mxu0 %v1405
  %1411 = vmatpush.msra.mxu0 %v1404
  %1412 = vmatpush.msra.mxu0 %v1403
  %1413 = vmatpush.msra.mxu0 %v1402
  %1414 = vmatpush.msra.mxu0 %v1401
  %1415 = vmatpush.msra.mxu0 %v1400
  %1416 = vmatpush.msra.mxu0 %v1399
  %1417 = vmatpush.msra.mxu0 %v1398
  %1418 = vmatpush.msra.mxu0 %v1397
  %1419 = vmatpush.msra.mxu0 %v1396
  %1420 = vmatpush.msra.mxu0 %v1395
  %1421 = vmatpush.msra.mxu0 %v1394
  %1422 = vmatpush.msra.mxu0 %v1393
  %1423 = vmatpush.msra.mxu0 %v1392
  %1424 = vmatmul.f32.gmra.mxu0 %v75
  %v1425 = vpop.f32.mrf.mxu0
  %v1426 = vadd.f32 0.0, %v1425
  %1427 = vmatmul.f32.gmra.mxu0 %v76
  %v1428 = vpop.f32.mrf.mxu0
  %v1429 = vadd.f32 0.0, %v1428
  %1430 = vdwg.mxu0
  %v1431 = vmax.f32 %v1426, 0.0
  %v1432 = vmax.f32 %v1429, 0.0
  %1433 = vmatpush.msra.mxu0 %v92
  %1434 = vmatpush.msra.mxu0 %v91
  %1435 = vmatpush.msra.mxu0 %v90
  %1436 = vmatpush.msra.mxu0 %v89
  %1437 = vmatpush.msra.mxu0 %v88
  %1438 = vmatpush.msra.mxu0 %v87
  %1439 = vmatpush.msra.mxu0 %v86
  %1440 = vmatpush.msra.mxu0 %v85
  %1441 = vmatpush.msra.mxu0 %v84
  %1442 = vmatpush.msra.mxu0 %v83
  %1443 = vmatpush.msra.mxu0 %v82
  %1444 = vmatpush.msra.mxu0 %v81
  %1445 = vmatpush.msra.mxu0 %v80
  %1446 = vmatpush.msra.mxu0 %v79
  %1447 = vmatpush.msra.mxu0 %v78
  %1448 = vmatpush.msra.mxu0 %v77
  %1449 = vmatmul.f32.gmra.mxu0 %v1431
  %v1450 = vpop.f32.mrf.mxu0
  %v1451 = vadd.f32 %v753, %v1450
  %1452 = vmatmul.f32.gmra.mxu0 %v1432
  %v1453 = vpop.f32.mrf.mxu0
  %v1454 = vadd.f32 %v753, %v1453
  %1455 = vdwg.mxu0
  %1456 = vst [vmem:[%s7 + $0x10] sm:$0xff] %v1451
  %1457 = vst [vmem:[%s7 + $0x18] sm:$0xff] %v1454
  // Predicated region
  $region30: #{temporal_gnn_forward.1} parent=0 // pred_check
    _
  $region31: #{temporal_gnn_forward.1} parent=0 // pred_check_branch
    %1459 = sbr.rel (0) target = $region33
  $region32: #{temporal_gnn_forward.1} parent=0 // pred_region
    _
  $region33: #{temporal_gnn_forward.1} parent=0 // pred_fallthru
    _
  // Predicated region
  $region34: #{temporal_gnn_forward.1} parent=0 // pred_check
    _
  $region35: #{temporal_gnn_forward.1} parent=0 // pred_check_branch
    %1461 = sbr.rel (0) target = $region37
  $region36: #{temporal_gnn_forward.1} parent=0 // pred_region
    _
  $region37: #{temporal_gnn_forward.1} parent=0 // pred_fallthru
    _

</llo_original>
